<compile_context>
chip_gen: v7x
topology: tpu7x:2x2x1
jax: 0.10.0
libtpu: 0.0.40
codegen_flags: <defaults>
</compile_context>

<pallas_src>
import jax
import jax.numpy as jnp
import numpy as np
from jax.experimental import pallas as pl
from jax.experimental.pallas import tpu as pltpu

LN_EPS = 1e-5  # PyTorch nn.LayerNorm default


def _round_up(x, m):
    return (x + m - 1) // m * m


def _layernorm(x, gamma, beta):
    mean = jnp.mean(x, axis=-1, keepdims=True)
    centered = x - mean
    var = jnp.mean(centered * centered, axis=-1, keepdims=True)
    return centered * jax.lax.rsqrt(var + LN_EPS) * gamma + beta


# ----------------------------------------------------------------------------
# Kernels
# ----------------------------------------------------------------------------
def _decoder_tail(h, g1_ref, be1_ref, w2_ref, b2_ref, g2_ref, be2_ref,
                  w3_ref, b3_ref, out_ref):
    """LayerNorm -> ReLU -> Linear -> LayerNorm -> ReLU -> Linear (fp32 LN,
    MXU matmuls in the weight dtype with fp32 accumulation)."""
    h = _layernorm(h, g1_ref[...], be1_ref[...])
    h = jnp.maximum(h, 0.0)

    h = jnp.dot(h.astype(w2_ref.dtype), w2_ref[...],
                preferred_element_type=jnp.float32)
    h = h + b2_ref[...]
    h = _layernorm(h, g2_ref[...], be2_ref[...])
    h = jnp.maximum(h, 0.0)

    out = jnp.dot(h.astype(w3_ref.dtype), w3_ref[...],
                  preferred_element_type=jnp.float32)
    out_ref[...] = (out + b3_ref[...]).astype(out_ref.dtype)


def _decoder_kernel_sampled(lat_ref, txt_ref,
                            w1l_ref, w1t_ref, b1_ref, g1_ref, be1_ref,
                            w2_ref, b2_ref, g2_ref, be2_ref,
                            w3_ref, b3_ref,
                            out_ref):
    # Layer 1 with the concat folded into two matmuls (no host concat pass).
    mm = w1t_ref.dtype
    h = jnp.dot(txt_ref[...].astype(mm), w1t_ref[...],
                preferred_element_type=jnp.float32)
    h = h + jnp.dot(lat_ref[...].astype(mm), w1l_ref[...],
                    preferred_element_type=jnp.float32)
    h = h + b1_ref[...]
    _decoder_tail(h, g1_ref, be1_ref, w2_ref, b2_ref, g2_ref, be2_ref,
                  w3_ref, b3_ref, out_ref)


def _decoder_kernel_det(txt_ref,
                        w1t_ref, b1_ref, g1_ref, be1_ref,
                        w2_ref, b2_ref, g2_ref, be2_ref,
                        w3_ref, b3_ref,
                        out_ref):
    # deterministic=True: latent == 0, so the latent half of layer 1 vanishes.
    h = jnp.dot(txt_ref[...].astype(w1t_ref.dtype), w1t_ref[...],
                preferred_element_type=jnp.float32)
    h = h + b1_ref[...]
    _decoder_tail(h, g1_ref, be1_ref, w2_ref, b2_ref, g2_ref, be2_ref,
                  w3_ref, b3_ref, out_ref)


# ----------------------------------------------------------------------------
# Wrapper
# ----------------------------------------------------------------------------
def _choose_batch_tile(batch, num_cores, max_tile=512):
    """Multiple-of-16 tile (bf16 sublane packing).  One grid step per
    TensorCore when the batch fits; otherwise a balanced, core-multiple number
    of steps with <= max_tile rows/step (amortizes ~0.35us/step overhead on
    single-TC v5e/v6e while keeping both v7x TCs fed via num_cores=2)."""
    steps = max(num_cores, pl.cdiv(batch, max_tile))
    steps = _round_up(steps, num_cores)
    return _round_up(pl.cdiv(batch, steps), 16)


def translator_vae_decode(params, latent_vector, text_embeddings, *,
                          batch_tile=None, num_cores=1,
                          out_dtype=jnp.float32):
    """Pallas implementation of TranslatorVAE.decode (the forward hot path).

    latent_vector may be None (deterministic forward: latent == prior mean 0),
    in which case the latent half of layer 1 is skipped entirely.
    """
    B, input_dim = text_embeddings.shape
    hidden_dim = params["b1"].shape[-1]
    latent_dim = params["w1_lat"].shape[0]
    deterministic = latent_vector is None

    if batch_tile is None:
        batch_tile = _choose_batch_tile(B, num_cores)
    batch_tile = min(_round_up(batch_tile, 16), _round_up(B, 16))

    # Pad ragged batches up to a tile multiple (no-op when B % batch_tile == 0,
    # which the tile chooser arranges whenever B is a multiple of 16).
    Bp = _round_up(B, batch_tile)
    if Bp != B:
        text_embeddings = jnp.pad(text_embeddings, ((0, Bp - B), (0, 0)))
        if not deterministic:
            latent_vector = jnp.pad(latent_vector, ((0, Bp - B), (0, 0)))

    grid = (Bp // batch_tile,)

    def row_spec(feat):
        return pl.BlockSpec((batch_tile, feat), lambda i: (i, 0))

    def const_spec(shape):
        # Grid-invariant operand (weights / bias / LN affine): fetched once.
        # NOTE: at hidden=256 the double-buffered weight footprint is <1 MiB;
        # if these dims scale, single-buffering the constants
        # (pipeline_mode=pl.Buffered(1)) halves their VMEM, which matters on
        # v7x's 64 MiB VMEM where each TC holds its own copy.
        return pl.BlockSpec(shape, lambda i: (0, 0))

    in_specs = []
    operands = []
    if not deterministic:
        in_specs.append(row_spec(latent_dim))
        operands.append(latent_vector)
    in_specs.append(row_spec(input_dim))
    operands.append(text_embeddings)
    if not deterministic:
        in_specs.append(const_spec((latent_dim, hidden_dim)))
        operands.append(params["w1_lat"])
    in_specs += [
        const_spec((input_dim, hidden_dim)),   # w1_txt
        const_spec((1, hidden_dim)),           # b1
        const_spec((1, hidden_dim)),           # gamma1
        const_spec((1, hidden_dim)),           # beta1
        const_spec((hidden_dim, hidden_dim)),  # w2
        const_spec((1, hidden_dim)),           # b2
        const_spec((1, hidden_dim)),           # gamma2
        const_spec((1, hidden_dim)),           # beta2
        const_spec((hidden_dim, input_dim)),   # w3
        const_spec((1, input_dim)),            # b3
    ]
    operands += [
        params["w1_txt"], params["b1"], params["gamma1"], params["beta1"],
        params["w2"], params["b2"], params["gamma2"], params["beta2"],
        params["w3"], params["b3"],
    ]
    out_spec = pl.BlockSpec((batch_tile, input_dim), lambda i: (i, 0))

    # Advisory cost estimate (weights counted once; grid steps re-reference
    # them from VMEM, so this slightly understates HBM traffic for big grids).
    k1 = input_dim + (0 if deterministic else latent_dim)
    flops = 2 * Bp * (k1 * hidden_dim + hidden_dim * hidden_dim
                      + hidden_dim * input_dim)
    w_itemsize = params["w1_txt"].dtype.itemsize
    bytes_accessed = int(
        Bp * k1 * 4                                        # fp32 activations in
        + Bp * input_dim * jnp.dtype(out_dtype).itemsize   # output writeback
        + w_itemsize * (k1 * hidden_dim + hidden_dim * hidden_dim
                        + hidden_dim * input_dim)          # weights
        + 4 * (5 * hidden_dim + input_dim))                # bias / LN affine

    kernel = _decoder_kernel_det if deterministic else _decoder_kernel_sampled

    out = pl.pallas_call(
        kernel,
        out_shape=jax.ShapeDtypeStruct((Bp, input_dim), out_dtype),
        grid_spec=pltpu.PrefetchScalarGridSpec(
            num_scalar_prefetch=0,
            grid=grid,
            in_specs=in_specs,
            out_specs=out_spec,
        ),
        compiler_params=pltpu.CompilerParams(
            dimension_semantics=("parallel",)),
        cost_estimate=pl.CostEstimate(
            flops=flops, transcendentals=0, bytes_accessed=bytes_accessed),
    )(*operands)

    return out if Bp == B else out[:B]


def translator_vae_forward(params, text_embeddings, *, key=None,
                           deterministic=False, **kwargs):
    """TranslatorVAE.forward: prior latent (mu=0, logvar=0) -> Pallas decoder."""
    if deterministic:
        latent = None  # latent == prior mean == 0 -> specialized kernel
    else:
        if key is None:
            raise ValueError("key is required when deterministic=False")
        latent_dim = params["w1_lat"].shape[0]
        # mu=0, logvar=0 => latent = eps ~ N(0, I).  Host-side RNG glue only.
        # TODO(synk): the eps draw could be fused in-kernel with pltpu.prng_*,
        # but that changes the RNG stream vs jax.random, so it stays host-side.
        latent = jax.random.normal(key, (text_embeddings.shape[0], latent_dim),
                                   jnp.float32)
    return translator_vae_decode(params, latent, text_embeddings, **kwargs)


# ----------------------------------------------------------------------------
# Parameters & pure-JAX reference
# ----------------------------------------------------------------------------
def init_params(key, input_dim, hidden_dim, latent_dim,
                matmul_dtype=jnp.bfloat16):
    """Synthetic decoder weights for TranslatorVAE (torch Linear default init).

    Weights are stored [in_features, out_features] (torch weight transposed) so
    the kernel computes x @ W + b, and W1 is pre-split into its latent / text
    row blocks so the kernel never needs the host-side concat.  `matmul_dtype`
    sets the MXU operand precision (bf16 default; jnp.float32 matches the
    PyTorch fp32 module numerics at higher MXU cost)."""
    ks = jax.random.split(key, 3)

    def lin(k, fan_in, fan_out):
        bound = 1.0 / float(np.sqrt(fan_in))
        kw, kb = jax.random.split(k)
        w = jax.random.uniform(kw, (fan_in, fan_out), jnp.float32, -bound, bound)
        b = jax.random.uniform(kb, (1, fan_out), jnp.float32, -bound, bound)
        return w.astype(matmul_dtype), b

    w1, b1 = lin(ks[0], latent_dim + input_dim, hidden_dim)
    w2, b2 = lin(ks[1], hidden_dim, hidden_dim)
    w3, b3 = lin(ks[2], hidden_dim, input_dim)

    return {
        "w1_lat": w1[:latent_dim], "w1_txt": w1[latent_dim:], "b1": b1,
        "gamma1": jnp.ones((1, hidden_dim), jnp.float32),
        "beta1": jnp.zeros((1, hidden_dim), jnp.float32),
        "w2": w2, "b2": b2,
        "gamma2": jnp.ones((1, hidden_dim), jnp.float32),
        "beta2": jnp.zeros((1, hidden_dim), jnp.float32),
        "w3": w3, "b3": b3,
    }


def reference_decode(params, latent_vector, text_embeddings):
    """Pure-JAX reference with identical numerics (same MXU operand dtype)."""
    mm = params["w1_txt"].dtype
    h = jnp.dot(text_embeddings.astype(mm), params["w1_txt"],
                preferred_element_type=jnp.float32)
    if latent_vector is not None:
        h = h + jnp.dot(latent_vector.astype(mm), params["w1_lat"],
                        preferred_element_type=jnp.float32)
    h = h + params["b1"]
    h = _layernorm(h, params["gamma1"], params["beta1"])
    h = jnp.maximum(h, 0.0)
    h = jnp.dot(h.astype(mm), params["w2"],
                preferred_element_type=jnp.float32) + params["b2"]
    h = _layernorm(h, params["gamma2"], params["beta2"])
    h = jnp.maximum(h, 0.0)
    return jnp.dot(h.astype(mm), params["w3"],
                   preferred_element_type=jnp.float32) + params["b3"]


if __name__ == "__main__":
    # Module-default feature sizes (input=512, hidden=256, latent=256), small batches.
    INPUT_DIM, HIDDEN_DIM, LATENT_DIM = 512, 256, 256

    key = jax.random.PRNGKey(0)
    k_params, k_text, k_eps = jax.random.split(key, 3)
    params = init_params(k_params, INPUT_DIM, HIDDEN_DIM, LATENT_DIM)

    # --- sampled path (deterministic=False): B % 16 == 0 -> no pad, no out-slice.
    B = 32
    text = jax.random.normal(k_text, (B, INPUT_DIM), jnp.float32)
    latent = jax.random.normal(k_eps, (B, LATENT_DIM), jnp.float32)  # eps ~ N(0, I)

    out = jax.block_until_ready(translator_vae_decode(params, latent, text))
    assert out.shape == (B, INPUT_DIM) and out.dtype == jnp.float32
    ref = reference_decode(params, latent, text)
    assert jnp.allclose(out, ref, atol=2e-2, rtol=2e-2), "sampled path mismatch"

    # --- deterministic=True path on a ragged batch (exercises padding + det kernel).
    B2 = 20
    text2 = text[:B2]
    out_det = jax.block_until_ready(
        translator_vae_forward(params, text2, deterministic=True))
    assert out_det.shape == (B2, INPUT_DIM)
    ref_det = reference_decode(params, None, text2)
    assert jnp.allclose(out_det, ref_det, atol=2e-2, rtol=2e-2), "det path mismatch"

    # --- full forward with in-script prior sampling (shape smoke test).
    out_fwd = jax.block_until_ready(
        translator_vae_forward(params, text2, key=jax.random.PRNGKey(1)))
    assert out_fwd.shape == (B2, INPUT_DIM)

    print("KERNEL_OK")
</pallas_src>

<mosaic_0001>
module attributes {stable_mosaic.version = 11 : i64} {
  func.func @_decoder_kernel_sampled(%arg0: i32, %arg1: memref<32x256xf32, #tpu.memory_space<vmem>>, %arg2: memref<32x512xf32, #tpu.memory_space<vmem>>, %arg3: memref<256x256xbf16, #tpu.memory_space<vmem>>, %arg4: memref<512x256xbf16, #tpu.memory_space<vmem>>, %arg5: memref<1x256xf32, #tpu.memory_space<vmem>>, %arg6: memref<1x256xf32, #tpu.memory_space<vmem>>, %arg7: memref<1x256xf32, #tpu.memory_space<vmem>>, %arg8: memref<256x256xbf16, #tpu.memory_space<vmem>>, %arg9: memref<1x256xf32, #tpu.memory_space<vmem>>, %arg10: memref<1x256xf32, #tpu.memory_space<vmem>>, %arg11: memref<1x256xf32, #tpu.memory_space<vmem>>, %arg12: memref<256x512xbf16, #tpu.memory_space<vmem>>, %arg13: memref<1x512xf32, #tpu.memory_space<vmem>>, %arg14: memref<32x512xf32, #tpu.memory_space<vmem>>) attributes {dimension_semantics = [#tpu.dimension_semantics<parallel>], iteration_bounds = array<i64: 1>, scalar_prefetch = 0 : i64, scratch_operands = 0 : i64, tpu.core_type = #tpu.core_type<tc>, window_params = [{transform_indices = @transform_0, window_bounds = array<i64: 32, 256>}, {transform_indices = @transform_1, window_bounds = array<i64: 32, 512>}, {pipeline_mode = #tpu.pipeline_mode<synchronous>, transform_indices = @transform_2, window_bounds = array<i64: 256, 256>}, {pipeline_mode = #tpu.pipeline_mode<synchronous>, transform_indices = @transform_3, window_bounds = array<i64: 512, 256>}, {pipeline_mode = #tpu.pipeline_mode<synchronous>, transform_indices = @transform_4, window_bounds = array<i64: 1, 256>}, {pipeline_mode = #tpu.pipeline_mode<synchronous>, transform_indices = @transform_5, window_bounds = array<i64: 1, 256>}, {pipeline_mode = #tpu.pipeline_mode<synchronous>, transform_indices = @transform_6, window_bounds = array<i64: 1, 256>}, {pipeline_mode = #tpu.pipeline_mode<synchronous>, transform_indices = @transform_7, window_bounds = array<i64: 256, 256>}, {pipeline_mode = #tpu.pipeline_mode<synchronous>, transform_indices = @transform_8, window_bounds = array<i64: 1, 256>}, {pipeline_mode = #tpu.pipeline_mode<synchronous>, transform_indices = @transform_9, window_bounds = array<i64: 1, 256>}, {pipeline_mode = #tpu.pipeline_mode<synchronous>, transform_indices = @transform_10, window_bounds = array<i64: 1, 256>}, {pipeline_mode = #tpu.pipeline_mode<synchronous>, transform_indices = @transform_11, window_bounds = array<i64: 256, 512>}, {pipeline_mode = #tpu.pipeline_mode<synchronous>, transform_indices = @transform_12, window_bounds = array<i64: 1, 512>}, {transform_indices = @transform_13, window_bounds = array<i64: 32, 512>}]} {
    %c0 = arith.constant 0 : index
    %c0_0 = arith.constant 0 : index
    %0 = vector.load %arg2[%c0, %c0_0] : memref<32x512xf32, #tpu.memory_space<vmem>>, vector<32x512xf32>
    %1 = arith.truncf %0 : vector<32x512xf32> to vector<32x512xbf16>
    %c0_1 = arith.constant 0 : index
    %c0_2 = arith.constant 0 : index
    %2 = vector.load %arg4[%c0_1, %c0_2] : memref<512x256xbf16, #tpu.memory_space<vmem>>, vector<512x256xbf16>
    %cst = arith.constant dense<0.000000e+00> : vector<32x256xf32>
    %3 = tpu.matmul %1, %2, %cst {dimension_numbers = #tpu.dot_dimension_numbers<[1], [0], [0], [1], [0, 0, 1, 1], [], []>} : vector<32x512xbf16>, vector<512x256xbf16>, vector<32x256xf32> -> vector<32x256xf32>
    %c0_3 = arith.constant 0 : index
    %c0_4 = arith.constant 0 : index
    %4 = vector.load %arg1[%c0_3, %c0_4] : memref<32x256xf32, #tpu.memory_space<vmem>>, vector<32x256xf32>
    %5 = arith.truncf %4 : vector<32x256xf32> to vector<32x256xbf16>
    %c0_5 = arith.constant 0 : index
    %c0_6 = arith.constant 0 : index
    %6 = vector.load %arg3[%c0_5, %c0_6] : memref<256x256xbf16, #tpu.memory_space<vmem>>, vector<256x256xbf16>
    %cst_7 = arith.constant dense<0.000000e+00> : vector<32x256xf32>
    %7 = tpu.matmul %5, %6, %cst_7 {dimension_numbers = #tpu.dot_dimension_numbers<[1], [0], [0], [1], [0, 0, 1, 1], [], []>} : vector<32x256xbf16>, vector<256x256xbf16>, vector<32x256xf32> -> vector<32x256xf32>
    %8 = arith.addf %3, %7 : vector<32x256xf32>
    %c0_8 = arith.constant 0 : index
    %c0_9 = arith.constant 0 : index
    %9 = vector.load %arg5[%c0_8, %c0_9] : memref<1x256xf32, #tpu.memory_space<vmem>>, vector<1x256xf32>
    %10 = vector.broadcast %9 : vector<1x256xf32> to vector<32x256xf32>
    %11 = arith.addf %8, %10 : vector<32x256xf32>
    %c0_10 = arith.constant 0 : index
    %c0_11 = arith.constant 0 : index
    %12 = vector.load %arg6[%c0_10, %c0_11] : memref<1x256xf32, #tpu.memory_space<vmem>>, vector<1x256xf32>
    %c0_12 = arith.constant 0 : index
    %c0_13 = arith.constant 0 : index
    %13 = vector.load %arg7[%c0_12, %c0_13] : memref<1x256xf32, #tpu.memory_space<vmem>>, vector<1x256xf32>
    %cst_14 = arith.constant dense<0.000000e+00> : vector<32xf32>
    %14 = vector.multi_reduction <add>, %11, %cst_14 [1] : vector<32x256xf32> to vector<32xf32>
    %15 = vector.shape_cast %14 : vector<32xf32> to vector<32x1xf32>
    %cst_15 = arith.constant 2.560000e+02 : f32
    %16 = vector.broadcast %cst_15 : f32 to vector<32x1xf32>
    %17 = arith.divf %15, %16 : vector<32x1xf32>
    %18 = vector.broadcast %17 : vector<32x1xf32> to vector<32x256xf32>
    %19 = arith.subf %11, %18 : vector<32x256xf32>
    %20 = arith.mulf %19, %19 : vector<32x256xf32>
    %cst_16 = arith.constant dense<0.000000e+00> : vector<32xf32>
    %21 = vector.multi_reduction <add>, %20, %cst_16 [1] : vector<32x256xf32> to vector<32xf32>
    %22 = vector.shape_cast %21 : vector<32xf32> to vector<32x1xf32>
    %cst_17 = arith.constant 2.560000e+02 : f32
    %23 = vector.broadcast %cst_17 : f32 to vector<32x1xf32>
    %24 = arith.divf %22, %23 : vector<32x1xf32>
    %cst_18 = arith.constant 9.99999974E-6 : f32
    %25 = vector.broadcast %cst_18 : f32 to vector<32x1xf32>
    %26 = arith.addf %24, %25 : vector<32x1xf32>
    %27 = math.rsqrt %26 : vector<32x1xf32>
    %28 = vector.broadcast %27 : vector<32x1xf32> to vector<32x256xf32>
    %29 = arith.mulf %19, %28 : vector<32x256xf32>
    %30 = vector.broadcast %12 : vector<1x256xf32> to vector<32x256xf32>
    %31 = arith.mulf %29, %30 : vector<32x256xf32>
    %32 = vector.broadcast %13 : vector<1x256xf32> to vector<32x256xf32>
    %33 = arith.addf %31, %32 : vector<32x256xf32>
    %cst_19 = arith.constant 0.000000e+00 : f32
    %34 = vector.broadcast %cst_19 : f32 to vector<32x256xf32>
    %35 = arith.maximumf %33, %34 : vector<32x256xf32>
    %36 = arith.truncf %35 : vector<32x256xf32> to vector<32x256xbf16>
    %c0_20 = arith.constant 0 : index
    %c0_21 = arith.constant 0 : index
    %37 = vector.load %arg8[%c0_20, %c0_21] : memref<256x256xbf16, #tpu.memory_space<vmem>>, vector<256x256xbf16>
    %cst_22 = arith.constant dense<0.000000e+00> : vector<32x256xf32>
    %38 = tpu.matmul %36, %37, %cst_22 {dimension_numbers = #tpu.dot_dimension_numbers<[1], [0], [0], [1], [0, 0, 1, 1], [], []>} : vector<32x256xbf16>, vector<256x256xbf16>, vector<32x256xf32> -> vector<32x256xf32>
    %c0_23 = arith.constant 0 : index
    %c0_24 = arith.constant 0 : index
    %39 = vector.load %arg9[%c0_23, %c0_24] : memref<1x256xf32, #tpu.memory_space<vmem>>, vector<1x256xf32>
    %40 = vector.broadcast %39 : vector<1x256xf32> to vector<32x256xf32>
    %41 = arith.addf %38, %40 : vector<32x256xf32>
    %c0_25 = arith.constant 0 : index
    %c0_26 = arith.constant 0 : index
    %42 = vector.load %arg10[%c0_25, %c0_26] : memref<1x256xf32, #tpu.memory_space<vmem>>, vector<1x256xf32>
    %c0_27 = arith.constant 0 : index
    %c0_28 = arith.constant 0 : index
    %43 = vector.load %arg11[%c0_27, %c0_28] : memref<1x256xf32, #tpu.memory_space<vmem>>, vector<1x256xf32>
    %cst_29 = arith.constant dense<0.000000e+00> : vector<32xf32>
    %44 = vector.multi_reduction <add>, %41, %cst_29 [1] : vector<32x256xf32> to vector<32xf32>
    %45 = vector.shape_cast %44 : vector<32xf32> to vector<32x1xf32>
    %cst_30 = arith.constant 2.560000e+02 : f32
    %46 = vector.broadcast %cst_30 : f32 to vector<32x1xf32>
    %47 = arith.divf %45, %46 : vector<32x1xf32>
    %48 = vector.broadcast %47 : vector<32x1xf32> to vector<32x256xf32>
    %49 = arith.subf %41, %48 : vector<32x256xf32>
    %50 = arith.mulf %49, %49 : vector<32x256xf32>
    %cst_31 = arith.constant dense<0.000000e+00> : vector<32xf32>
    %51 = vector.multi_reduction <add>, %50, %cst_31 [1] : vector<32x256xf32> to vector<32xf32>
    %52 = vector.shape_cast %51 : vector<32xf32> to vector<32x1xf32>
    %cst_32 = arith.constant 2.560000e+02 : f32
    %53 = vector.broadcast %cst_32 : f32 to vector<32x1xf32>
    %54 = arith.divf %52, %53 : vector<32x1xf32>
    %cst_33 = arith.constant 9.99999974E-6 : f32
    %55 = vector.broadcast %cst_33 : f32 to vector<32x1xf32>
    %56 = arith.addf %54, %55 : vector<32x1xf32>
    %57 = math.rsqrt %56 : vector<32x1xf32>
    %58 = vector.broadcast %57 : vector<32x1xf32> to vector<32x256xf32>
    %59 = arith.mulf %49, %58 : vector<32x256xf32>
    %60 = vector.broadcast %42 : vector<1x256xf32> to vector<32x256xf32>
    %61 = arith.mulf %59, %60 : vector<32x256xf32>
    %62 = vector.broadcast %43 : vector<1x256xf32> to vector<32x256xf32>
    %63 = arith.addf %61, %62 : vector<32x256xf32>
    %cst_34 = arith.constant 0.000000e+00 : f32
    %64 = vector.broadcast %cst_34 : f32 to vector<32x256xf32>
    %65 = arith.maximumf %63, %64 : vector<32x256xf32>
    %66 = arith.truncf %65 : vector<32x256xf32> to vector<32x256xbf16>
    %c0_35 = arith.constant 0 : index
    %c0_36 = arith.constant 0 : index
    %67 = vector.load %arg12[%c0_35, %c0_36] : memref<256x512xbf16, #tpu.memory_space<vmem>>, vector<256x512xbf16>
    %cst_37 = arith.constant dense<0.000000e+00> : vector<32x512xf32>
    %68 = tpu.matmul %66, %67, %cst_37 {dimension_numbers = #tpu.dot_dimension_numbers<[1], [0], [0], [1], [0, 0, 1, 1], [], []>} : vector<32x256xbf16>, vector<256x512xbf16>, vector<32x512xf32> -> vector<32x512xf32>
    %c0_38 = arith.constant 0 : index
    %c0_39 = arith.constant 0 : index
    %69 = vector.load %arg13[%c0_38, %c0_39] : memref<1x512xf32, #tpu.memory_space<vmem>>, vector<1x512xf32>
    %70 = vector.broadcast %69 : vector<1x512xf32> to vector<32x512xf32>
    %71 = arith.addf %68, %70 : vector<32x512xf32>
    %c0_40 = arith.constant 0 : index
    %c0_41 = arith.constant 0 : index
    %72 = vector.load %arg14[%c0_40, %c0_41] : memref<32x512xf32, #tpu.memory_space<vmem>>, vector<32x512xf32>
    tpu.vector_store %arg14[%c0_40, %c0_41], %71 {strides = array<i32>} : memref<32x512xf32, #tpu.memory_space<vmem>>, vector<32x512xf32>,
    return
  }
  func.func @transform_0(%arg0: i32) -> (i32, i32) {
    %c0_i32 = arith.constant 0 : i32
    %c0_i32_0 = arith.constant 0 : i32
    return %arg0, %c0_i32 : i32, i32
  }
  func.func @transform_1(%arg0: i32) -> (i32, i32) {
    %c0_i32 = arith.constant 0 : i32
    %c0_i32_0 = arith.constant 0 : i32
    return %arg0, %c0_i32 : i32, i32
  }
  func.func @transform_2(%arg0: i32) -> (i32, i32) {
    %c0_i32 = arith.constant 0 : i32
    %c0_i32_0 = arith.constant 0 : i32
    %c0_i32_1 = arith.constant 0 : i32
    return %c0_i32, %c0_i32_0 : i32, i32
  }
  func.func @transform_3(%arg0: i32) -> (i32, i32) {
    %c0_i32 = arith.constant 0 : i32
    %c0_i32_0 = arith.constant 0 : i32
    %c0_i32_1 = arith.constant 0 : i32
    return %c0_i32, %c0_i32_0 : i32, i32
  }
  func.func @transform_4(%arg0: i32) -> (i32, i32) {
    %c0_i32 = arith.constant 0 : i32
    %c0_i32_0 = arith.constant 0 : i32
    %c0_i32_1 = arith.constant 0 : i32
    return %c0_i32, %c0_i32_0 : i32, i32
  }
  func.func @transform_5(%arg0: i32) -> (i32, i32) {
    %c0_i32 = arith.constant 0 : i32
    %c0_i32_0 = arith.constant 0 : i32
    %c0_i32_1 = arith.constant 0 : i32
    return %c0_i32, %c0_i32_0 : i32, i32
  }
  func.func @transform_6(%arg0: i32) -> (i32, i32) {
    %c0_i32 = arith.constant 0 : i32
    %c0_i32_0 = arith.constant 0 : i32
    %c0_i32_1 = arith.constant 0 : i32
    return %c0_i32, %c0_i32_0 : i32, i32
  }
  func.func @transform_7(%arg0: i32) -> (i32, i32) {
    %c0_i32 = arith.constant 0 : i32
    %c0_i32_0 = arith.constant 0 : i32
    %c0_i32_1 = arith.constant 0 : i32
    return %c0_i32, %c0_i32_0 : i32, i32
  }
  func.func @transform_8(%arg0: i32) -> (i32, i32) {
    %c0_i32 = arith.constant 0 : i32
    %c0_i32_0 = arith.constant 0 : i32
    %c0_i32_1 = arith.constant 0 : i32
    return %c0_i32, %c0_i32_0 : i32, i32
  }
  func.func @transform_9(%arg0: i32) -> (i32, i32) {
    %c0_i32 = arith.constant 0 : i32
    %c0_i32_0 = arith.constant 0 : i32
    %c0_i32_1 = arith.constant 0 : i32
    return %c0_i32, %c0_i32_0 : i32, i32
  }
  func.func @transform_10(%arg0: i32) -> (i32, i32) {
    %c0_i32 = arith.constant 0 : i32
    %c0_i32_0 = arith.constant 0 : i32
    %c0_i32_1 = arith.constant 0 : i32
    return %c0_i32, %c0_i32_0 : i32, i32
  }
  func.func @transform_11(%arg0: i32) -> (i32, i32) {
    %c0_i32 = arith.constant 0 : i32
    %c0_i32_0 = arith.constant 0 : i32
    %c0_i32_1 = arith.constant 0 : i32
    return %c0_i32, %c0_i32_0 : i32, i32
  }
  func.func @transform_12(%arg0: i32) -> (i32, i32) {
    %c0_i32 = arith.constant 0 : i32
    %c0_i32_0 = arith.constant 0 : i32
    %c0_i32_1 = arith.constant 0 : i32
    return %c0_i32, %c0_i32_0 : i32, i32
  }
  func.func @transform_13(%arg0: i32) -> (i32, i32) {
    %c0_i32 = arith.constant 0 : i32
    %c0_i32_0 = arith.constant 0 : i32
    return %arg0, %c0_i32 : i32, i32
  }
}

</mosaic_0001>

<llo_original>
// kernel: tpu_custom_call.1
$region0: #{tpu_custom_call.1}
  #allocation0 [shape = 'u32[]', space=smem, size = 0x4, offset = 0x4, fixed_abs, tag = 'smem constant byte address 0x4 - core index']
  #allocation1 [shape = 'u32[144,128]{1,0:T(1,128)}', space=vmem, size = 0x12000, scoped, tag = 'internal scratch']
  %s0 = inlined_call_operand.hbm [shape: f32[32,256], index: 0, kind: input, shape index: {}]
  %s1 = inlined_call_operand.hbm [shape: f32[32,512], index: 1, kind: input, shape index: {}]
  %s2 = inlined_call_operand.hbm [shape: bf16[256,256], index: 2, kind: input, shape index: {}]
  %s3 = inlined_call_operand.hbm [shape: bf16[512,256], index: 3, kind: input, shape index: {}]
  %s4 = inlined_call_operand.vmem [shape: f32[1,256], index: 4, kind: input, shape index: {}]
  %s5 = inlined_call_operand.vmem [shape: f32[1,256], index: 5, kind: input, shape index: {}]
  %s6 = inlined_call_operand.vmem [shape: f32[1,256], index: 6, kind: input, shape index: {}]
  %s7 = inlined_call_operand.hbm [shape: bf16[256,256], index: 7, kind: input, shape index: {}]
  %s8 = inlined_call_operand.vmem [shape: f32[1,256], index: 8, kind: input, shape index: {}]
  %s9 = inlined_call_operand.vmem [shape: f32[1,256], index: 9, kind: input, shape index: {}]
  %s10 = inlined_call_operand.vmem [shape: f32[1,256], index: 10, kind: input, shape index: {}]
  %s11 = inlined_call_operand.hbm [shape: bf16[256,512], index: 11, kind: input, shape index: {}]
  %s12 = inlined_call_operand.vmem [shape: f32[1,512], index: 12, kind: input, shape index: {}]
  %s13 = inlined_call_operand.hbm [shape: f32[32,512], index: 13, kind: output, shape index: {}]
  %s14 = sld [smem:[#allocation0]]
  $region86: #{tpu_custom_call.1} parent=0
    _
  %s16 = ssub.s32 1, %s14
  %s17 = scalar_select 0, %s16, %s14
  $region1: #{tpu_custom_call.1} parent=0
    #allocation2 [shape = 'u8[32768]{0}', space=vmem, size = 0x8000, scoped, tag = 'input window, operand 0, single buffered']
    #allocation3 [shape = 's32[1]{0}', space=sflag, size = 0x4, scoped, tag = 'scoped memory for tpu_custom_call.1']
    #allocation4 [shape = 's32[1]{0}', space=sflag, size = 0x4, scoped, tag = 'scoped memory for tpu_custom_call.1']
    #allocation5 [shape = 'u8[65536]{0}', space=vmem, size = 0x10000, scoped, tag = 'input window, operand 1, single buffered']
    #allocation6 [shape = 's32[1]{0}', space=sflag, size = 0x4, scoped, tag = 'scoped memory for tpu_custom_call.1']
    #allocation7 [shape = 'u8[131072]{0}', space=vmem, size = 0x20000, scoped, tag = 'input window, operand 2, single buffered']
    #allocation8 [shape = 'u8[262144]{0}', space=vmem, size = 0x40000, scoped, tag = 'input window, operand 3, single buffered']
    #allocation9 [shape = 's32[1]{0}', space=sflag, size = 0x4, scoped, tag = 'scoped memory for tpu_custom_call.1']
    #allocation10 [shape = 'u8[131072]{0}', space=vmem, size = 0x20000, scoped, tag = 'input window, operand 7, single buffered']
    #allocation11 [shape = 'u8[262144]{0}', space=vmem, size = 0x40000, scoped, tag = 'input window, operand 11, single buffered']
    #allocation12 [shape = 's32[1]{0}', space=sflag, size = 0x4, scoped, tag = 'scoped memory for tpu_custom_call.1']
    #allocation13 [shape = 'u8[65536]{0}', space=vmem, size = 0x10000, scoped, tag = 'output window, operand 0, single buffered']
    %18 = vsyncpa [#allocation3], 0
    %19 = vsyncpa [#allocation6], 0
    %20 = vsyncpa [#allocation9], 0
    %21 = vsyncpa [#allocation12], 0
    %22 = vsyncpa [#allocation4], 0
    // Predicated region
    $region2: #{tpu_custom_call.1} parent=1 // pred_check
      _
    $region3: #{tpu_custom_call.1} parent=1 // pred_check_branch
      %24 = sbr.rel (0) target = $region5
    $region4: #{tpu_custom_call.1} parent=1 // pred_region
      %s26 = ssub.s32 1024, 1024
      %27 = vsyncadd [#allocation3], %s26
      %s28 = sshll.u32 [#allocation2], 4
      %s29 = int_to_ptr.vmem [resolvable:$true] %s28
      %34 = dma.hbm_to_vmem [thread:$0]  %s0, 1024, %s29, [#allocation3], 256, 256, 16
    $region5: #{tpu_custom_call.1} parent=1 // pred_fallthru
      _
    // Predicated region
    $region6: #{tpu_custom_call.1} parent=1 // pred_check
      _
    $region7: #{tpu_custom_call.1} parent=1 // pred_check_branch
      %36 = sbr.rel (0) target = $region9
    $region8: #{tpu_custom_call.1} parent=1 // pred_region
      %s38 = ssub.s32 2048, 2048
      %39 = vsyncadd [#allocation6], %s38
      %s40 = sshll.u32 [#allocation5], 4
      %s41 = int_to_ptr.vmem [resolvable:$true] %s40
      %46 = dma.hbm_to_vmem [thread:$0]  %s1, 2048, %s41, [#allocation6], 512, 512, 32
    $region9: #{tpu_custom_call.1} parent=1 // pred_fallthru
      _
    // Predicated region
    $region10: #{tpu_custom_call.1} parent=1 // pred_check
      _
    $region11: #{tpu_custom_call.1} parent=1 // pred_check_branch
      %48 = sbr.rel (0) target = $region13
    $region12: #{tpu_custom_call.1} parent=1 // pred_region
      %s50 = ssub.s32 4096, 4096
      %51 = vsyncadd [#allocation6], %s50
      %s52 = sshll.u32 [#allocation7], 4
      %s53 = int_to_ptr.vmem [resolvable:$true] %s52
      %58 = dma.hbm_to_vmem [thread:$0]  %s2, 4096, %s53, [#allocation6], 128, 128, 8
    $region13: #{tpu_custom_call.1} parent=1 // pred_fallthru
      _
    // Predicated region
    $region14: #{tpu_custom_call.1} parent=1 // pred_check
      _
    $region15: #{tpu_custom_call.1} parent=1 // pred_check_branch
      %60 = sbr.rel (0) target = $region17
    $region16: #{tpu_custom_call.1} parent=1 // pred_region
      %s62 = ssub.s32 8192, 8192
      %63 = vsyncadd [#allocation9], %s62
      %s64 = sshll.u32 [#allocation8], 4
      %s65 = int_to_ptr.vmem [resolvable:$true] %s64
      %70 = dma.hbm_to_vmem [thread:$0]  %s3, 8192, %s65, [#allocation9], 128, 128, 8
    $region17: #{tpu_custom_call.1} parent=1 // pred_fallthru
      _
    // Predicated region
    $region18: #{tpu_custom_call.1} parent=1 // pred_check
      _
    $region19: #{tpu_custom_call.1} parent=1 // pred_check_branch
      %72 = sbr.rel (0) target = $region21
    $region20: #{tpu_custom_call.1} parent=1 // pred_region
      _
    $region21: #{tpu_custom_call.1} parent=1 // pred_fallthru
      _
    // Predicated region
    $region22: #{tpu_custom_call.1} parent=1 // pred_check
      _
    $region23: #{tpu_custom_call.1} parent=1 // pred_check_branch
      %74 = sbr.rel (0) target = $region25
    $region24: #{tpu_custom_call.1} parent=1 // pred_region
      _
    $region25: #{tpu_custom_call.1} parent=1 // pred_fallthru
      _
    // Predicated region
    $region26: #{tpu_custom_call.1} parent=1 // pred_check
      _
    $region27: #{tpu_custom_call.1} parent=1 // pred_check_branch
      %76 = sbr.rel (0) target = $region29
    $region28: #{tpu_custom_call.1} parent=1 // pred_region
      _
    $region29: #{tpu_custom_call.1} parent=1 // pred_fallthru
      _
    // Predicated region
    $region30: #{tpu_custom_call.1} parent=1 // pred_check
      _
    $region31: #{tpu_custom_call.1} parent=1 // pred_check_branch
      %78 = sbr.rel (0) target = $region33
    $region32: #{tpu_custom_call.1} parent=1 // pred_region
      %s80 = ssub.s32 4096, 4096
      %81 = vsyncadd [#allocation9], %s80
      %s82 = sshll.u32 [#allocation10], 4
      %s83 = int_to_ptr.vmem [resolvable:$true] %s82
      %88 = dma.hbm_to_vmem [thread:$0]  %s7, 4096, %s83, [#allocation9], 128, 128, 8
    $region33: #{tpu_custom_call.1} parent=1 // pred_fallthru
      _
    // Predicated region
    $region34: #{tpu_custom_call.1} parent=1 // pred_check
      _
    $region35: #{tpu_custom_call.1} parent=1 // pred_check_branch
      %90 = sbr.rel (0) target = $region37
    $region36: #{tpu_custom_call.1} parent=1 // pred_region
      _
    $region37: #{tpu_custom_call.1} parent=1 // pred_fallthru
      _
    // Predicated region
    $region38: #{tpu_custom_call.1} parent=1 // pred_check
      _
    $region39: #{tpu_custom_call.1} parent=1 // pred_check_branch
      %92 = sbr.rel (0) target = $region41
    $region40: #{tpu_custom_call.1} parent=1 // pred_region
      _
    $region41: #{tpu_custom_call.1} parent=1 // pred_fallthru
      _
    // Predicated region
    $region42: #{tpu_custom_call.1} parent=1 // pred_check
      _
    $region43: #{tpu_custom_call.1} parent=1 // pred_check_branch
      %94 = sbr.rel (0) target = $region45
    $region44: #{tpu_custom_call.1} parent=1 // pred_region
      _
    $region45: #{tpu_custom_call.1} parent=1 // pred_fallthru
      _
    // Predicated region
    $region46: #{tpu_custom_call.1} parent=1 // pred_check
      _
    $region47: #{tpu_custom_call.1} parent=1 // pred_check_branch
      %96 = sbr.rel (0) target = $region49
    $region48: #{tpu_custom_call.1} parent=1 // pred_region
      %s98 = ssub.s32 8192, 8192
      %99 = vsyncadd [#allocation12], %s98
      %s100 = sshll.u32 [#allocation11], 4
      %s101 = int_to_ptr.vmem [resolvable:$true] %s100
      %106 = dma.hbm_to_vmem [thread:$0]  %s11, 8192, %s101, [#allocation12], 256, 256, 16
    $region49: #{tpu_custom_call.1} parent=1 // pred_fallthru
      _
    // Predicated region
    $region50: #{tpu_custom_call.1} parent=1 // pred_check
      _
    $region51: #{tpu_custom_call.1} parent=1 // pred_check_branch
      %108 = sbr.rel (0) target = $region53
    $region52: #{tpu_custom_call.1} parent=1 // pred_region
      _
    $region53: #{tpu_custom_call.1} parent=1 // pred_fallthru
      _
    // Predicated region
    $region54: #{tpu_custom_call.1} parent=1 // pred_check
      _
    $region55: #{tpu_custom_call.1} parent=1 // pred_check_branch
      %110 = sbr.rel (0) target = $region57
    $region56: #{tpu_custom_call.1} parent=1 // pred_region
      %111 = dma.done [#allocation3], 1024
    $region57: #{tpu_custom_call.1} parent=1 // pred_fallthru
      _
    // Predicated region
    $region58: #{tpu_custom_call.1} parent=1 // pred_check
      _
    $region59: #{tpu_custom_call.1} parent=1 // pred_check_branch
      %113 = sbr.rel (0) target = $region61
    $region60: #{tpu_custom_call.1} parent=1 // pred_region
      %114 = dma.done [#allocation6], 2048
    $region61: #{tpu_custom_call.1} parent=1 // pred_fallthru
      _
    // Predicated region
    $region62: #{tpu_custom_call.1} parent=1 // pred_check
      _
    $region63: #{tpu_custom_call.1} parent=1 // pred_check_branch
      %116 = sbr.rel (0) target = $region65
    $region64: #{tpu_custom_call.1} parent=1 // pred_region
      %117 = dma.done [#allocation6], 4096
    $region65: #{tpu_custom_call.1} parent=1 // pred_fallthru
      _
    // Predicated region
    $region66: #{tpu_custom_call.1} parent=1 // pred_check
      _
    $region67: #{tpu_custom_call.1} parent=1 // pred_check_branch
      %119 = sbr.rel (0) target = $region69
    $region68: #{tpu_custom_call.1} parent=1 // pred_region
      %120 = dma.done [#allocation9], 8192
    $region69: #{tpu_custom_call.1} parent=1 // pred_fallthru
      _
    // Predicated region
    $region70: #{tpu_custom_call.1} parent=1 // pred_check
      _
    $region71: #{tpu_custom_call.1} parent=1 // pred_check_branch
      %122 = sbr.rel (0) target = $region73
    $region72: #{tpu_custom_call.1} parent=1 // pred_region
      %123 = dma.done [#allocation9], 4096
    $region73: #{tpu_custom_call.1} parent=1 // pred_fallthru
      _
    // Predicated region
    $region74: #{tpu_custom_call.1} parent=1 // pred_check
      _
    $region75: #{tpu_custom_call.1} parent=1 // pred_check_branch
      %125 = sbr.rel (0) target = $region77
    $region76: #{tpu_custom_call.1} parent=1 // pred_region
      %126 = dma.done [#allocation12], 8192
    $region77: #{tpu_custom_call.1} parent=1 // pred_fallthru
      _
    %v127 = vld [vmem:[#allocation5] sm:$0xff]
    %v128 = vld [vmem:[#allocation5 + $0x8] sm:$0xff]
    %v129 = vld [vmem:[#allocation5 + $0x10] sm:$0xff]
    %v130 = vld [vmem:[#allocation5 + $0x18] sm:$0xff]
    %v131 = vld [vmem:[#allocation5 + $0x20] sm:$0xff]
    %v132 = vld [vmem:[#allocation5 + $0x28] sm:$0xff]
    %v133 = vld [vmem:[#allocation5 + $0x30] sm:$0xff]
    %v134 = vld [vmem:[#allocation5 + $0x38] sm:$0xff]
    %v135 = vld [vmem:[#allocation5 + $0x40] sm:$0xff]
    %v136 = vld [vmem:[#allocation5 + $0x48] sm:$0xff]
    %v137 = vld [vmem:[#allocation5 + $0x50] sm:$0xff]
    %v138 = vld [vmem:[#allocation5 + $0x58] sm:$0xff]
    %v139 = vld [vmem:[#allocation5 + $0x60] sm:$0xff]
    %v140 = vld [vmem:[#allocation5 + $0x68] sm:$0xff]
    %v141 = vld [vmem:[#allocation5 + $0x70] sm:$0xff]
    %v142 = vld [vmem:[#allocation5 + $0x78] sm:$0xff]
    %v143 = vpack.c.bf16 %v131, %v127
    %v144 = vpack.c.bf16 %v132, %v128
    %v145 = vpack.c.bf16 %v133, %v129
    %v146 = vpack.c.bf16 %v134, %v130
    %v147 = vpack.c.bf16 %v139, %v135
    %v148 = vpack.c.bf16 %v140, %v136
    %v149 = vpack.c.bf16 %v141, %v137
    %v150 = vpack.c.bf16 %v142, %v138
    %v151 = vld [vmem:[#allocation8] sm:$0xff]
    %v152 = vld [vmem:[#allocation8 + $0x8] sm:$0xff]
    %v153 = vld [vmem:[#allocation8 + $0x10] sm:$0xff]
    %v154 = vld [vmem:[#allocation8 + $0x18] sm:$0xff]
    %v155 = vld [vmem:[#allocation8 + $0x20] sm:$0xff]
    %v156 = vld [vmem:[#allocation8 + $0x28] sm:$0xff]
    %v157 = vld [vmem:[#allocation8 + $0x30] sm:$0xff]
    %v158 = vld [vmem:[#allocation8 + $0x38] sm:$0xff]
    %v159 = vld [vmem:[#allocation8 + $0x40] sm:$0xff]
    %v160 = vld [vmem:[#allocation8 + $0x48] sm:$0xff]
    %v161 = vld [vmem:[#allocation8 + $0x50] sm:$0xff]
    %v162 = vld [vmem:[#allocation8 + $0x58] sm:$0xff]
    %v163 = vld [vmem:[#allocation8 + $0x60] sm:$0xff]
    %v164 = vld [vmem:[#allocation8 + $0x68] sm:$0xff]
    %v165 = vld [vmem:[#allocation8 + $0x70] sm:$0xff]
    %v166 = vld [vmem:[#allocation8 + $0x78] sm:$0xff]
    %v167 = vld [vmem:[#allocation8 + $0x80] sm:$0xff]
    %v168 = vld [vmem:[#allocation8 + $0x88] sm:$0xff]
    %v169 = vld [vmem:[#allocation8 + $0x90] sm:$0xff]
    %v170 = vld [vmem:[#allocation8 + $0x98] sm:$0xff]
    %v171 = vld [vmem:[#allocation8 + $0xa0] sm:$0xff]
    %v172 = vld [vmem:[#allocation8 + $0xa8] sm:$0xff]
    %v173 = vld [vmem:[#allocation8 + $0xb0] sm:$0xff]
    %v174 = vld [vmem:[#allocation8 + $0xb8] sm:$0xff]
    %v175 = vld [vmem:[#allocation8 + $0xc0] sm:$0xff]
    %v176 = vld [vmem:[#allocation8 + $0xc8] sm:$0xff]
    %v177 = vld [vmem:[#allocation8 + $0xd0] sm:$0xff]
    %v178 = vld [vmem:[#allocation8 + $0xd8] sm:$0xff]
    %v179 = vld [vmem:[#allocation8 + $0xe0] sm:$0xff]
    %v180 = vld [vmem:[#allocation8 + $0xe8] sm:$0xff]
    %v181 = vld [vmem:[#allocation8 + $0xf0] sm:$0xff]
    %v182 = vld [vmem:[#allocation8 + $0xf8] sm:$0xff]
    %v183 = vld [vmem:[#allocation8 + $0x100] sm:$0xff]
    %v184 = vld [vmem:[#allocation8 + $0x108] sm:$0xff]
    %v185 = vld [vmem:[#allocation8 + $0x110] sm:$0xff]
    %v186 = vld [vmem:[#allocation8 + $0x118] sm:$0xff]
    %v187 = vld [vmem:[#allocation8 + $0x120] sm:$0xff]
    %v188 = vld [vmem:[#allocation8 + $0x128] sm:$0xff]
    %v189 = vld [vmem:[#allocation8 + $0x130] sm:$0xff]
    %v190 = vld [vmem:[#allocation8 + $0x138] sm:$0xff]
    %v191 = vld [vmem:[#allocation8 + $0x140] sm:$0xff]
    %v192 = vld [vmem:[#allocation8 + $0x148] sm:$0xff]
    %v193 = vld [vmem:[#allocation8 + $0x150] sm:$0xff]
    %v194 = vld [vmem:[#allocation8 + $0x158] sm:$0xff]
    %v195 = vld [vmem:[#allocation8 + $0x160] sm:$0xff]
    %v196 = vld [vmem:[#allocation8 + $0x168] sm:$0xff]
    %v197 = vld [vmem:[#allocation8 + $0x170] sm:$0xff]
    %v198 = vld [vmem:[#allocation8 + $0x178] sm:$0xff]
    %v199 = vld [vmem:[#allocation8 + $0x180] sm:$0xff]
    %v200 = vld [vmem:[#allocation8 + $0x188] sm:$0xff]
    %v201 = vld [vmem:[#allocation8 + $0x190] sm:$0xff]
    %v202 = vld [vmem:[#allocation8 + $0x198] sm:$0xff]
    %v203 = vld [vmem:[#allocation8 + $0x1a0] sm:$0xff]
    %v204 = vld [vmem:[#allocation8 + $0x1a8] sm:$0xff]
    %v205 = vld [vmem:[#allocation8 + $0x1b0] sm:$0xff]
    %v206 = vld [vmem:[#allocation8 + $0x1b8] sm:$0xff]
    %v207 = vld [vmem:[#allocation8 + $0x1c0] sm:$0xff]
    %v208 = vld [vmem:[#allocation8 + $0x1c8] sm:$0xff]
    %v209 = vld [vmem:[#allocation8 + $0x1d0] sm:$0xff]
    %v210 = vld [vmem:[#allocation8 + $0x1d8] sm:$0xff]
    %v211 = vld [vmem:[#allocation8 + $0x1e0] sm:$0xff]
    %v212 = vld [vmem:[#allocation8 + $0x1e8] sm:$0xff]
    %v213 = vld [vmem:[#allocation8 + $0x1f0] sm:$0xff]
    %v214 = vld [vmem:[#allocation8 + $0x1f8] sm:$0xff]
    %v215 = vld [vmem:[#allocation2] sm:$0xff]
    %v216 = vld [vmem:[#allocation2 + $0x8] sm:$0xff]
    %v217 = vld [vmem:[#allocation2 + $0x10] sm:$0xff]
    %v218 = vld [vmem:[#allocation2 + $0x18] sm:$0xff]
    %v219 = vld [vmem:[#allocation2 + $0x20] sm:$0xff]
    %v220 = vld [vmem:[#allocation2 + $0x28] sm:$0xff]
    %v221 = vld [vmem:[#allocation2 + $0x30] sm:$0xff]
    %v222 = vld [vmem:[#allocation2 + $0x38] sm:$0xff]
    %v223 = vpack.c.bf16 %v217, %v215
    %v224 = vpack.c.bf16 %v218, %v216
    %v225 = vpack.c.bf16 %v221, %v219
    %v226 = vpack.c.bf16 %v222, %v220
    %v227 = vld [vmem:[#allocation7] sm:$0xff]
    %v228 = vld [vmem:[#allocation7 + $0x8] sm:$0xff]
    %v229 = vld [vmem:[#allocation7 + $0x10] sm:$0xff]
    %v230 = vld [vmem:[#allocation7 + $0x18] sm:$0xff]
    %v231 = vld [vmem:[#allocation7 + $0x20] sm:$0xff]
    %v232 = vld [vmem:[#allocation7 + $0x28] sm:$0xff]
    %v233 = vld [vmem:[#allocation7 + $0x30] sm:$0xff]
    %v234 = vld [vmem:[#allocation7 + $0x38] sm:$0xff]
    %v235 = vld [vmem:[#allocation7 + $0x40] sm:$0xff]
    %v236 = vld [vmem:[#allocation7 + $0x48] sm:$0xff]
    %v237 = vld [vmem:[#allocation7 + $0x50] sm:$0xff]
    %v238 = vld [vmem:[#allocation7 + $0x58] sm:$0xff]
    %v239 = vld [vmem:[#allocation7 + $0x60] sm:$0xff]
    %v240 = vld [vmem:[#allocation7 + $0x68] sm:$0xff]
    %v241 = vld [vmem:[#allocation7 + $0x70] sm:$0xff]
    %v242 = vld [vmem:[#allocation7 + $0x78] sm:$0xff]
    %v243 = vld [vmem:[#allocation7 + $0x80] sm:$0xff]
    %v244 = vld [vmem:[#allocation7 + $0x88] sm:$0xff]
    %v245 = vld [vmem:[#allocation7 + $0x90] sm:$0xff]
    %v246 = vld [vmem:[#allocation7 + $0x98] sm:$0xff]
    %v247 = vld [vmem:[#allocation7 + $0xa0] sm:$0xff]
    %v248 = vld [vmem:[#allocation7 + $0xa8] sm:$0xff]
    %v249 = vld [vmem:[#allocation7 + $0xb0] sm:$0xff]
    %v250 = vld [vmem:[#allocation7 + $0xb8] sm:$0xff]
    %v251 = vld [vmem:[#allocation7 + $0xc0] sm:$0xff]
    %v252 = vld [vmem:[#allocation7 + $0xc8] sm:$0xff]
    %v253 = vld [vmem:[#allocation7 + $0xd0] sm:$0xff]
    %v254 = vld [vmem:[#allocation7 + $0xd8] sm:$0xff]
    %v255 = vld [vmem:[#allocation7 + $0xe0] sm:$0xff]
    %v256 = vld [vmem:[#allocation7 + $0xe8] sm:$0xff]
    %v257 = vld [vmem:[#allocation7 + $0xf0] sm:$0xff]
    %v258 = vld [vmem:[#allocation7 + $0xf8] sm:$0xff]
    %v291 = vunpack.c.l.b16 %v227
    %v292 = vunpack.c.h.b16 %v227
    %v293 = vunpack.c.l.b16 %v228
    %v294 = vunpack.c.h.b16 %v228
    %v295 = vunpack.c.l.b16 %v229
    %v296 = vunpack.c.h.b16 %v229
    %v297 = vunpack.c.l.b16 %v230
    %v298 = vunpack.c.h.b16 %v230
    %v299 = vunpack.c.l.b16 %v231
    %v300 = vunpack.c.h.b16 %v231
    %v301 = vunpack.c.l.b16 %v232
    %v302 = vunpack.c.h.b16 %v232
    %v303 = vunpack.c.l.b16 %v233
    %v304 = vunpack.c.h.b16 %v233
    %v305 = vunpack.c.l.b16 %v234
    %v306 = vunpack.c.h.b16 %v234
    %v307 = vunpack.c.l.b16 %v235
    %v308 = vunpack.c.h.b16 %v235
    %v309 = vunpack.c.l.b16 %v236
    %v310 = vunpack.c.h.b16 %v236
    %v311 = vunpack.c.l.b16 %v237
    %v312 = vunpack.c.h.b16 %v237
    %v313 = vunpack.c.l.b16 %v238
    %v314 = vunpack.c.h.b16 %v238
    %v315 = vunpack.c.l.b16 %v239
    %v316 = vunpack.c.h.b16 %v239
    %v317 = vunpack.c.l.b16 %v240
    %v318 = vunpack.c.h.b16 %v240
    %v319 = vunpack.c.l.b16 %v241
    %v320 = vunpack.c.h.b16 %v241
    %v321 = vunpack.c.l.b16 %v242
    %v322 = vunpack.c.h.b16 %v242
    %v323 = vunpack.c.l.b16 %v243
    %v324 = vunpack.c.h.b16 %v243
    %v325 = vunpack.c.l.b16 %v244
    %v326 = vunpack.c.h.b16 %v244
    %v327 = vunpack.c.l.b16 %v245
    %v328 = vunpack.c.h.b16 %v245
    %v329 = vunpack.c.l.b16 %v246
    %v330 = vunpack.c.h.b16 %v246
    %v331 = vunpack.c.l.b16 %v247
    %v332 = vunpack.c.h.b16 %v247
    %v333 = vunpack.c.l.b16 %v248
    %v334 = vunpack.c.h.b16 %v248
    %v335 = vunpack.c.l.b16 %v249
    %v336 = vunpack.c.h.b16 %v249
    %v337 = vunpack.c.l.b16 %v250
    %v338 = vunpack.c.h.b16 %v250
    %v339 = vunpack.c.l.b16 %v251
    %v340 = vunpack.c.h.b16 %v251
    %v341 = vunpack.c.l.b16 %v252
    %v342 = vunpack.c.h.b16 %v252
    %v343 = vunpack.c.l.b16 %v253
    %v344 = vunpack.c.h.b16 %v253
    %v345 = vunpack.c.l.b16 %v254
    %v346 = vunpack.c.h.b16 %v254
    %v347 = vunpack.c.l.b16 %v255
    %v348 = vunpack.c.h.b16 %v255
    %v349 = vunpack.c.l.b16 %v256
    %v350 = vunpack.c.h.b16 %v256
    %v351 = vunpack.c.l.b16 %v257
    %v352 = vunpack.c.h.b16 %v257
    %v353 = vunpack.c.l.b16 %v258
    %v354 = vunpack.c.h.b16 %v258
    %v355 = vpack.c.b16 %v293, %v291
    %v356 = vpack.c.b16 %v294, %v292
    %v357 = vpack.c.b16 %v297, %v295
    %v358 = vpack.c.b16 %v298, %v296
    %v359 = vpack.c.b16 %v301, %v299
    %v360 = vpack.c.b16 %v302, %v300
    %v361 = vpack.c.b16 %v305, %v303
    %v362 = vpack.c.b16 %v306, %v304
    %v363 = vpack.c.b16 %v309, %v307
    %v364 = vpack.c.b16 %v310, %v308
    %v365 = vpack.c.b16 %v313, %v311
    %v366 = vpack.c.b16 %v314, %v312
    %v367 = vpack.c.b16 %v317, %v315
    %v368 = vpack.c.b16 %v318, %v316
    %v369 = vpack.c.b16 %v321, %v319
    %v370 = vpack.c.b16 %v322, %v320
    %v371 = vpack.c.b16 %v325, %v323
    %v372 = vpack.c.b16 %v326, %v324
    %v373 = vpack.c.b16 %v329, %v327
    %v374 = vpack.c.b16 %v330, %v328
    %v375 = vpack.c.b16 %v333, %v331
    %v376 = vpack.c.b16 %v334, %v332
    %v377 = vpack.c.b16 %v337, %v335
    %v378 = vpack.c.b16 %v338, %v336
    %v379 = vpack.c.b16 %v341, %v339
    %v380 = vpack.c.b16 %v342, %v340
    %v381 = vpack.c.b16 %v345, %v343
    %v382 = vpack.c.b16 %v346, %v344
    %v383 = vpack.c.b16 %v349, %v347
    %v384 = vpack.c.b16 %v350, %v348
    %v385 = vpack.c.b16 %v353, %v351
    %v386 = vpack.c.b16 %v354, %v352
    %419 = vmatprep.subr.bf16.mxu0 %v356
    %420 = vmatpush1.bf16.msra.mxu0 %v355
    %421 = vmatprep.subr.bf16.mxu0 %v358
    %422 = vmatpush1.bf16.msra.mxu0 %v357
    %423 = vmatprep.subr.bf16.mxu0 %v360
    %424 = vmatpush1.bf16.msra.mxu0 %v359
    %425 = vmatprep.subr.bf16.mxu0 %v362
    %426 = vmatpush1.bf16.msra.mxu0 %v361
    %427 = vmatprep.subr.bf16.mxu0 %v364
    %428 = vmatpush1.bf16.msra.mxu0 %v363
    %429 = vmatprep.subr.bf16.mxu0 %v366
    %430 = vmatpush1.bf16.msra.mxu0 %v365
    %431 = vmatprep.subr.bf16.mxu0 %v368
    %432 = vmatpush1.bf16.msra.mxu0 %v367
    %433 = vmatprep.subr.bf16.mxu0 %v370
    %434 = vmatpush1.bf16.msra.mxu0 %v369
    %435 = vmatprep.subr.bf16.mxu0 %v372
    %436 = vmatpush1.bf16.msra.mxu0 %v371
    %437 = vmatprep.subr.bf16.mxu0 %v374
    %438 = vmatpush1.bf16.msra.mxu0 %v373
    %439 = vmatprep.subr.bf16.mxu0 %v376
    %440 = vmatpush1.bf16.msra.mxu0 %v375
    %441 = vmatprep.subr.bf16.mxu0 %v378
    %442 = vmatpush1.bf16.msra.mxu0 %v377
    %443 = vmatprep.subr.bf16.mxu0 %v380
    %444 = vmatpush1.bf16.msra.mxu0 %v379
    %445 = vmatprep.subr.bf16.mxu0 %v382
    %446 = vmatpush1.bf16.msra.mxu0 %v381
    %447 = vmatprep.subr.bf16.mxu0 %v384
    %448 = vmatpush1.bf16.msra.mxu0 %v383
    %449 = vmatprep.subr.bf16.mxu0 %v386
    %450 = vmatpush1.bf16.msra.mxu0 %v385
    %451 = vmatprep.mubr.bf16.mxu0 %v224
    %452 = vmatmul.mubr.bf16.gmra.mrb[0].mxu0 %v223
    %v453 = vpop.f32.mrb[0].mxu0
    %v454 = vadd.f32 0.0, %v453
    %v455 = vpop.f32.mrb[0].mxu0
    %v456 = vadd.f32 0.0, %v455
    %v457 = vpop.f32.mrb[0].mxu0
    %v458 = vadd.f32 0.0, %v457
    %v459 = vpop.f32.mrb[0].mxu0
    %v460 = vadd.f32 0.0, %v459
    %461 = vmatprep.mubr.bf16.mxu0 %v226
    %462 = vmatmul.mubr.bf16.gmra.mrb[0].mxu0 %v225
    %v463 = vpop.f32.mrb[0].mxu0
    %v464 = vadd.f32 0.0, %v463
    %v465 = vpop.f32.mrb[0].mxu0
    %v466 = vadd.f32 0.0, %v465
    %v467 = vpop.f32.mrb[0].mxu0
    %v468 = vadd.f32 0.0, %v467
    %v469 = vpop.f32.mrb[0].mxu0
    %v470 = vadd.f32 0.0, %v469
    %471 = vdwg.mxu0
    %v536 = vunpack.c.l.b16 %v151
    %v537 = vunpack.c.h.b16 %v151
    %v538 = vunpack.c.l.b16 %v152
    %v539 = vunpack.c.h.b16 %v152
    %v540 = vunpack.c.l.b16 %v153
    %v541 = vunpack.c.h.b16 %v153
    %v542 = vunpack.c.l.b16 %v154
    %v543 = vunpack.c.h.b16 %v154
    %v544 = vunpack.c.l.b16 %v155
    %v545 = vunpack.c.h.b16 %v155
    %v546 = vunpack.c.l.b16 %v156
    %v547 = vunpack.c.h.b16 %v156
    %v548 = vunpack.c.l.b16 %v157
    %v549 = vunpack.c.h.b16 %v157
    %v550 = vunpack.c.l.b16 %v158
    %v551 = vunpack.c.h.b16 %v158
    %v552 = vunpack.c.l.b16 %v159
    %v553 = vunpack.c.h.b16 %v159
    %v554 = vunpack.c.l.b16 %v160
    %v555 = vunpack.c.h.b16 %v160
    %v556 = vunpack.c.l.b16 %v161
    %v557 = vunpack.c.h.b16 %v161
    %v558 = vunpack.c.l.b16 %v162
    %v559 = vunpack.c.h.b16 %v162
    %v560 = vunpack.c.l.b16 %v163
    %v561 = vunpack.c.h.b16 %v163
    %v562 = vunpack.c.l.b16 %v164
    %v563 = vunpack.c.h.b16 %v164
    %v564 = vunpack.c.l.b16 %v165
    %v565 = vunpack.c.h.b16 %v165
    %v566 = vunpack.c.l.b16 %v166
    %v567 = vunpack.c.h.b16 %v166
    %v568 = vunpack.c.l.b16 %v167
    %v569 = vunpack.c.h.b16 %v167
    %v570 = vunpack.c.l.b16 %v168
    %v571 = vunpack.c.h.b16 %v168
    %v572 = vunpack.c.l.b16 %v169
    %v573 = vunpack.c.h.b16 %v169
    %v574 = vunpack.c.l.b16 %v170
    %v575 = vunpack.c.h.b16 %v170
    %v576 = vunpack.c.l.b16 %v171
    %v577 = vunpack.c.h.b16 %v171
    %v578 = vunpack.c.l.b16 %v172
    %v579 = vunpack.c.h.b16 %v172
    %v580 = vunpack.c.l.b16 %v173
    %v581 = vunpack.c.h.b16 %v173
    %v582 = vunpack.c.l.b16 %v174
    %v583 = vunpack.c.h.b16 %v174
    %v584 = vunpack.c.l.b16 %v175
    %v585 = vunpack.c.h.b16 %v175
    %v586 = vunpack.c.l.b16 %v176
    %v587 = vunpack.c.h.b16 %v176
    %v588 = vunpack.c.l.b16 %v177
    %v589 = vunpack.c.h.b16 %v177
    %v590 = vunpack.c.l.b16 %v178
    %v591 = vunpack.c.h.b16 %v178
    %v592 = vunpack.c.l.b16 %v179
    %v593 = vunpack.c.h.b16 %v179
    %v594 = vunpack.c.l.b16 %v180
    %v595 = vunpack.c.h.b16 %v180
    %v596 = vunpack.c.l.b16 %v181
    %v597 = vunpack.c.h.b16 %v181
    %v598 = vunpack.c.l.b16 %v182
    %v599 = vunpack.c.h.b16 %v182
    %v600 = vunpack.c.l.b16 %v183
    %v601 = vunpack.c.h.b16 %v183
    %v602 = vunpack.c.l.b16 %v184
    %v603 = vunpack.c.h.b16 %v184
    %v604 = vunpack.c.l.b16 %v185
    %v605 = vunpack.c.h.b16 %v185
    %v606 = vunpack.c.l.b16 %v186
    %v607 = vunpack.c.h.b16 %v186
    %v608 = vunpack.c.l.b16 %v187
    %v609 = vunpack.c.h.b16 %v187
    %v610 = vunpack.c.l.b16 %v188
    %v611 = vunpack.c.h.b16 %v188
    %v612 = vunpack.c.l.b16 %v189
    %v613 = vunpack.c.h.b16 %v189
    %v614 = vunpack.c.l.b16 %v190
    %v615 = vunpack.c.h.b16 %v190
    %v616 = vunpack.c.l.b16 %v191
    %v617 = vunpack.c.h.b16 %v191
    %v618 = vunpack.c.l.b16 %v192
    %v619 = vunpack.c.h.b16 %v192
    %v620 = vunpack.c.l.b16 %v193
    %v621 = vunpack.c.h.b16 %v193
    %v622 = vunpack.c.l.b16 %v194
    %v623 = vunpack.c.h.b16 %v194
    %v624 = vunpack.c.l.b16 %v195
    %v625 = vunpack.c.h.b16 %v195
    %v626 = vunpack.c.l.b16 %v196
    %v627 = vunpack.c.h.b16 %v196
    %v628 = vunpack.c.l.b16 %v197
    %v629 = vunpack.c.h.b16 %v197
    %v630 = vunpack.c.l.b16 %v198
    %v631 = vunpack.c.h.b16 %v198
    %v632 = vunpack.c.l.b16 %v199
    %v633 = vunpack.c.h.b16 %v199
    %v634 = vunpack.c.l.b16 %v200
    %v635 = vunpack.c.h.b16 %v200
    %v636 = vunpack.c.l.b16 %v201
    %v637 = vunpack.c.h.b16 %v201
    %v638 = vunpack.c.l.b16 %v202
    %v639 = vunpack.c.h.b16 %v202
    %v640 = vunpack.c.l.b16 %v203
    %v641 = vunpack.c.h.b16 %v203
    %v642 = vunpack.c.l.b16 %v204
    %v643 = vunpack.c.h.b16 %v204
    %v644 = vunpack.c.l.b16 %v205
    %v645 = vunpack.c.h.b16 %v205
    %v646 = vunpack.c.l.b16 %v206
    %v647 = vunpack.c.h.b16 %v206
    %v648 = vunpack.c.l.b16 %v207
    %v649 = vunpack.c.h.b16 %v207
    %v650 = vunpack.c.l.b16 %v208
    %v651 = vunpack.c.h.b16 %v208
    %v652 = vunpack.c.l.b16 %v209
    %v653 = vunpack.c.h.b16 %v209
    %v654 = vunpack.c.l.b16 %v210
    %v655 = vunpack.c.h.b16 %v210
    %v656 = vunpack.c.l.b16 %v211
    %v657 = vunpack.c.h.b16 %v211
    %v658 = vunpack.c.l.b16 %v212
    %v659 = vunpack.c.h.b16 %v212
    %v660 = vunpack.c.l.b16 %v213
    %v661 = vunpack.c.h.b16 %v213
    %v662 = vunpack.c.l.b16 %v214
    %v663 = vunpack.c.h.b16 %v214
    %v664 = vpack.c.b16 %v538, %v536
    %v665 = vpack.c.b16 %v539, %v537
    %v666 = vpack.c.b16 %v542, %v540
    %v667 = vpack.c.b16 %v543, %v541
    %v668 = vpack.c.b16 %v546, %v544
    %v669 = vpack.c.b16 %v547, %v545
    %v670 = vpack.c.b16 %v550, %v548
    %v671 = vpack.c.b16 %v551, %v549
    %v672 = vpack.c.b16 %v554, %v552
    %v673 = vpack.c.b16 %v555, %v553
    %v674 = vpack.c.b16 %v558, %v556
    %v675 = vpack.c.b16 %v559, %v557
    %v676 = vpack.c.b16 %v562, %v560
    %v677 = vpack.c.b16 %v563, %v561
    %v678 = vpack.c.b16 %v566, %v564
    %v679 = vpack.c.b16 %v567, %v565
    %v680 = vpack.c.b16 %v570, %v568
    %v681 = vpack.c.b16 %v571, %v569
    %v682 = vpack.c.b16 %v574, %v572
    %v683 = vpack.c.b16 %v575, %v573
    %v684 = vpack.c.b16 %v578, %v576
    %v685 = vpack.c.b16 %v579, %v577
    %v686 = vpack.c.b16 %v582, %v580
    %v687 = vpack.c.b16 %v583, %v581
    %v688 = vpack.c.b16 %v586, %v584
    %v689 = vpack.c.b16 %v587, %v585
    %v690 = vpack.c.b16 %v590, %v588
    %v691 = vpack.c.b16 %v591, %v589
    %v692 = vpack.c.b16 %v594, %v592
    %v693 = vpack.c.b16 %v595, %v593
    %v694 = vpack.c.b16 %v598, %v596
    %v695 = vpack.c.b16 %v599, %v597
    %v696 = vpack.c.b16 %v602, %v600
    %v697 = vpack.c.b16 %v603, %v601
    %v698 = vpack.c.b16 %v606, %v604
    %v699 = vpack.c.b16 %v607, %v605
    %v700 = vpack.c.b16 %v610, %v608
    %v701 = vpack.c.b16 %v611, %v609
    %v702 = vpack.c.b16 %v614, %v612
    %v703 = vpack.c.b16 %v615, %v613
    %v704 = vpack.c.b16 %v618, %v616
    %v705 = vpack.c.b16 %v619, %v617
    %v706 = vpack.c.b16 %v622, %v620
    %v707 = vpack.c.b16 %v623, %v621
    %v708 = vpack.c.b16 %v626, %v624
    %v709 = vpack.c.b16 %v627, %v625
    %v710 = vpack.c.b16 %v630, %v628
    %v711 = vpack.c.b16 %v631, %v629
    %v712 = vpack.c.b16 %v634, %v632
    %v713 = vpack.c.b16 %v635, %v633
    %v714 = vpack.c.b16 %v638, %v636
    %v715 = vpack.c.b16 %v639, %v637
    %v716 = vpack.c.b16 %v642, %v640
    %v717 = vpack.c.b16 %v643, %v641
    %v718 = vpack.c.b16 %v646, %v644
    %v719 = vpack.c.b16 %v647, %v645
    %v720 = vpack.c.b16 %v650, %v648
    %v721 = vpack.c.b16 %v651, %v649
    %v722 = vpack.c.b16 %v654, %v652
    %v723 = vpack.c.b16 %v655, %v653
    %v724 = vpack.c.b16 %v658, %v656
    %v725 = vpack.c.b16 %v659, %v657
    %v726 = vpack.c.b16 %v662, %v660
    %v727 = vpack.c.b16 %v663, %v661
    %792 = vmatprep.subr.bf16.mxu0 %v665
    %793 = vmatpush1.bf16.msra.mxu0 %v664
    %794 = vmatprep.subr.bf16.mxu0 %v667
    %795 = vmatpush1.bf16.msra.mxu0 %v666
    %796 = vmatprep.subr.bf16.mxu0 %v669
    %797 = vmatpush1.bf16.msra.mxu0 %v668
    %798 = vmatprep.subr.bf16.mxu0 %v671
    %799 = vmatpush1.bf16.msra.mxu0 %v670
    %800 = vmatprep.subr.bf16.mxu0 %v673
    %801 = vmatpush1.bf16.msra.mxu0 %v672
    %802 = vmatprep.subr.bf16.mxu0 %v675
    %803 = vmatpush1.bf16.msra.mxu0 %v674
    %804 = vmatprep.subr.bf16.mxu0 %v677
    %805 = vmatpush1.bf16.msra.mxu0 %v676
    %806 = vmatprep.subr.bf16.mxu0 %v679
    %807 = vmatpush1.bf16.msra.mxu0 %v678
    %808 = vmatprep.subr.bf16.mxu0 %v681
    %809 = vmatpush1.bf16.msra.mxu0 %v680
    %810 = vmatprep.subr.bf16.mxu0 %v683
    %811 = vmatpush1.bf16.msra.mxu0 %v682
    %812 = vmatprep.subr.bf16.mxu0 %v685
    %813 = vmatpush1.bf16.msra.mxu0 %v684
    %814 = vmatprep.subr.bf16.mxu0 %v687
    %815 = vmatpush1.bf16.msra.mxu0 %v686
    %816 = vmatprep.subr.bf16.mxu0 %v689
    %817 = vmatpush1.bf16.msra.mxu0 %v688
    %818 = vmatprep.subr.bf16.mxu0 %v691
    %819 = vmatpush1.bf16.msra.mxu0 %v690
    %820 = vmatprep.subr.bf16.mxu0 %v693
    %821 = vmatpush1.bf16.msra.mxu0 %v692
    %822 = vmatprep.subr.bf16.mxu0 %v695
    %823 = vmatpush1.bf16.msra.mxu0 %v694
    %824 = vmatprep.mubr.bf16.mxu0 %v144
    %825 = vmatmul.mubr.bf16.gmra.mrb[0].mxu0 %v143
    %v826 = vpop.f32.mrb[0].mxu0
    %v827 = vadd.f32 %v454, %v826
    %v828 = vpop.f32.mrb[0].mxu0
    %v829 = vadd.f32 %v456, %v828
    %v830 = vpop.f32.mrb[0].mxu0
    %v831 = vadd.f32 %v458, %v830
    %v832 = vpop.f32.mrb[0].mxu0
    %v833 = vadd.f32 %v460, %v832
    %834 = vmatprep.mubr.bf16.mxu0 %v148
    %835 = vmatmul.mubr.bf16.gmra.mrb[0].mxu0 %v147
    %v836 = vpop.f32.mrb[0].mxu0
    %v837 = vadd.f32 %v464, %v836
    %v838 = vpop.f32.mrb[0].mxu0
    %v839 = vadd.f32 %v466, %v838
    %v840 = vpop.f32.mrb[0].mxu0
    %v841 = vadd.f32 %v468, %v840
    %v842 = vpop.f32.mrb[0].mxu0
    %v843 = vadd.f32 %v470, %v842
    %844 = vdwg.mxu0
    %845 = vmatprep.subr.bf16.mxu0 %v697
    %846 = vmatpush1.bf16.msra.mxu0 %v696
    %847 = vmatprep.subr.bf16.mxu0 %v699
    %848 = vmatpush1.bf16.msra.mxu0 %v698
    %849 = vmatprep.subr.bf16.mxu0 %v701
    %850 = vmatpush1.bf16.msra.mxu0 %v700
    %851 = vmatprep.subr.bf16.mxu0 %v703
    %852 = vmatpush1.bf16.msra.mxu0 %v702
    %853 = vmatprep.subr.bf16.mxu0 %v705
    %854 = vmatpush1.bf16.msra.mxu0 %v704
    %855 = vmatprep.subr.bf16.mxu0 %v707
    %856 = vmatpush1.bf16.msra.mxu0 %v706
    %857 = vmatprep.subr.bf16.mxu0 %v709
    %858 = vmatpush1.bf16.msra.mxu0 %v708
    %859 = vmatprep.subr.bf16.mxu0 %v711
    %860 = vmatpush1.bf16.msra.mxu0 %v710
    %861 = vmatprep.subr.bf16.mxu0 %v713
    %862 = vmatpush1.bf16.msra.mxu0 %v712
    %863 = vmatprep.subr.bf16.mxu0 %v715
    %864 = vmatpush1.bf16.msra.mxu0 %v714
    %865 = vmatprep.subr.bf16.mxu0 %v717
    %866 = vmatpush1.bf16.msra.mxu0 %v716
    %867 = vmatprep.subr.bf16.mxu0 %v719
    %868 = vmatpush1.bf16.msra.mxu0 %v718
    %869 = vmatprep.subr.bf16.mxu0 %v721
    %870 = vmatpush1.bf16.msra.mxu0 %v720
    %871 = vmatprep.subr.bf16.mxu0 %v723
    %872 = vmatpush1.bf16.msra.mxu0 %v722
    %873 = vmatprep.subr.bf16.mxu0 %v725
    %874 = vmatpush1.bf16.msra.mxu0 %v724
    %875 = vmatprep.subr.bf16.mxu0 %v727
    %876 = vmatpush1.bf16.msra.mxu0 %v726
    %877 = vmatprep.mubr.bf16.mxu0 %v146
    %878 = vmatmul.mubr.bf16.gmra.mrb[0].mxu0 %v145
    %v879 = vpop.f32.mrb[0].mxu0
    %v880 = vadd.f32 %v827, %v879
    %v881 = vpop.f32.mrb[0].mxu0
    %v882 = vadd.f32 %v829, %v881
    %v883 = vpop.f32.mrb[0].mxu0
    %v884 = vadd.f32 %v831, %v883
    %v885 = vpop.f32.mrb[0].mxu0
    %v886 = vadd.f32 %v833, %v885
    %887 = vmatprep.mubr.bf16.mxu0 %v150
    %888 = vmatmul.mubr.bf16.gmra.mrb[0].mxu0 %v149
    %v889 = vpop.f32.mrb[0].mxu0
    %v890 = vadd.f32 %v837, %v889
    %v891 = vpop.f32.mrb[0].mxu0
    %v892 = vadd.f32 %v839, %v891
    %v893 = vpop.f32.mrb[0].mxu0
    %v894 = vadd.f32 %v841, %v893
    %v895 = vpop.f32.mrb[0].mxu0
    %v896 = vadd.f32 %v843, %v895
    %897 = vdwg.mxu0
    %v898 = vld [vmem:[%s4] sm:$0x3]
    %v900 = vlaneseq
    %v901 = vshrl.u32 %v900, 7
    %v902 = vsub.s32 0, %v901
    %v903 = vrot.slane %v898, %v902
    %v904 = vlaneseq
    %v905 = vshrl.u32 %v904, 7
    %v906 = vsub.s32 1, %v905
    %v907 = vrot.slane %v898, %v906
    %v910 = vadd.f32 %v880, %v903
    %v911 = vadd.f32 %v882, %v907
    %v912 = vadd.f32 %v884, %v903
    %v913 = vadd.f32 %v886, %v907
    %v914 = vadd.f32 %v890, %v903
    %v915 = vadd.f32 %v892, %v907
    %v916 = vadd.f32 %v894, %v903
    %v917 = vadd.f32 %v896, %v907
    %v918 = vld [vmem:[%s5] sm:$0x3]
    %v919 = vld [vmem:[%s6] sm:$0x3]
    %v920 = vadd.f32 %v910, %v911
    %921 = vadd.xlane.f32.xlu0 %v920
    %v922 = vpop.xlane.xlu0 %921
    %v923 = vadd.f32 %v912, %v913
    %924 = vadd.xlane.f32.xlu0 %v923
    %v925 = vpop.xlane.xlu0 %924
    %v926 = vadd.f32 %v914, %v915
    %927 = vadd.xlane.f32.xlu0 %v926
    %v928 = vpop.xlane.xlu0 %927
    %v929 = vadd.f32 %v916, %v917
    %930 = vadd.xlane.f32.xlu0 %v929
    %v931 = vpop.xlane.xlu0 %930
    %v932 = vrcp.pop 256.0
    %v933 = vmul.f32 %v922, %v932
    %v934 = vmul.f32 %v925, %v932
    %v935 = vmul.f32 %v928, %v932
    %v936 = vmul.f32 %v931, %v932
    %v937 = vsub.f32 %v910, %v933
    %v938 = vsub.f32 %v911, %v933
    %v939 = vsub.f32 %v912, %v934
    %v940 = vsub.f32 %v913, %v934
    %v941 = vsub.f32 %v914, %v935
    %v942 = vsub.f32 %v915, %v935
    %v943 = vsub.f32 %v916, %v936
    %v944 = vsub.f32 %v917, %v936
    %v945 = vmul.f32 %v937, %v937
    %v946 = vmul.f32 %v938, %v938
    %v947 = vmul.f32 %v939, %v939
    %v948 = vmul.f32 %v940, %v940
    %v949 = vmul.f32 %v941, %v941
    %v950 = vmul.f32 %v942, %v942
    %v951 = vmul.f32 %v943, %v943
    %v952 = vmul.f32 %v944, %v944
    %v953 = vadd.f32 %v945, %v946
    %954 = vadd.xlane.f32.xlu0 %v953
    %v955 = vpop.xlane.xlu0 %954
    %v956 = vadd.f32 %v947, %v948
    %957 = vadd.xlane.f32.xlu0 %v956
    %v958 = vpop.xlane.xlu0 %957
    %v959 = vadd.f32 %v949, %v950
    %960 = vadd.xlane.f32.xlu0 %v959
    %v961 = vpop.xlane.xlu0 %960
    %v962 = vadd.f32 %v951, %v952
    %963 = vadd.xlane.f32.xlu0 %v962
    %v964 = vpop.xlane.xlu0 %963
    %v965 = vmul.f32 %v955, %v932
    %v966 = vmul.f32 %v958, %v932
    %v967 = vmul.f32 %v961, %v932
    %v968 = vmul.f32 %v964, %v932
    %v969 = vadd.f32 %v965, 1e-05
    %v970 = vadd.f32 %v966, 1e-05
    %v971 = vadd.f32 %v967, 1e-05
    %v972 = vadd.f32 %v968, 1e-05
    %v973 = vrsqrt.pop %v969
    %v974 = vrsqrt.pop %v970
    %v975 = vrsqrt.pop %v971
    %v976 = vrsqrt.pop %v972
    %v977 = vmul.f32 %v937, %v973
    %v978 = vmul.f32 %v938, %v973
    %v979 = vmul.f32 %v939, %v974
    %v980 = vmul.f32 %v940, %v974
    %v981 = vmul.f32 %v941, %v975
    %v982 = vmul.f32 %v942, %v975
    %v983 = vmul.f32 %v943, %v976
    %v984 = vmul.f32 %v944, %v976
    %v986 = vlaneseq
    %v987 = vshrl.u32 %v986, 7
    %v988 = vsub.s32 0, %v987
    %v989 = vrot.slane %v918, %v988
    %v990 = vlaneseq
    %v991 = vshrl.u32 %v990, 7
    %v992 = vsub.s32 1, %v991
    %v993 = vrot.slane %v918, %v992
    %v996 = vmul.f32 %v977, %v989
    %v997 = vmul.f32 %v978, %v993
    %v998 = vmul.f32 %v979, %v989
    %v999 = vmul.f32 %v980, %v993
    %v1000 = vmul.f32 %v981, %v989
    %v1001 = vmul.f32 %v982, %v993
    %v1002 = vmul.f32 %v983, %v989
    %v1003 = vmul.f32 %v984, %v993
    %v1005 = vlaneseq
    %v1006 = vshrl.u32 %v1005, 7
    %v1007 = vsub.s32 0, %v1006
    %v1008 = vrot.slane %v919, %v1007
    %v1009 = vlaneseq
    %v1010 = vshrl.u32 %v1009, 7
    %v1011 = vsub.s32 1, %v1010
    %v1012 = vrot.slane %v919, %v1011
    %v1015 = vadd.f32 %v996, %v1008
    %v1016 = vadd.f32 %v997, %v1012
    %v1017 = vadd.f32 %v998, %v1008
    %v1018 = vadd.f32 %v999, %v1012
    %v1019 = vadd.f32 %v1000, %v1008
    %v1020 = vadd.f32 %v1001, %v1012
    %v1021 = vadd.f32 %v1002, %v1008
    %v1022 = vadd.f32 %v1003, %v1012
    %v1023 = vmax.f32 %v1015, 0.0
    %v1024 = vmax.f32 %v1016, 0.0
    %v1025 = vmax.f32 %v1017, 0.0
    %v1026 = vmax.f32 %v1018, 0.0
    %v1027 = vmax.f32 %v1019, 0.0
    %v1028 = vmax.f32 %v1020, 0.0
    %v1029 = vmax.f32 %v1021, 0.0
    %v1030 = vmax.f32 %v1022, 0.0
    %v1031 = vpack.c.bf16 %v1025, %v1023
    %v1032 = vpack.c.bf16 %v1026, %v1024
    %v1033 = vpack.c.bf16 %v1029, %v1027
    %v1034 = vpack.c.bf16 %v1030, %v1028
    %v1035 = vld [vmem:[#allocation10] sm:$0xff]
    %v1036 = vld [vmem:[#allocation10 + $0x8] sm:$0xff]
    %v1037 = vld [vmem:[#allocation10 + $0x10] sm:$0xff]
    %v1038 = vld [vmem:[#allocation10 + $0x18] sm:$0xff]
    %v1039 = vld [vmem:[#allocation10 + $0x20] sm:$0xff]
    %v1040 = vld [vmem:[#allocation10 + $0x28] sm:$0xff]
    %v1041 = vld [vmem:[#allocation10 + $0x30] sm:$0xff]
    %v1042 = vld [vmem:[#allocation10 + $0x38] sm:$0xff]
    %v1043 = vld [vmem:[#allocation10 + $0x40] sm:$0xff]
    %v1044 = vld [vmem:[#allocation10 + $0x48] sm:$0xff]
    %v1045 = vld [vmem:[#allocation10 + $0x50] sm:$0xff]
    %v1046 = vld [vmem:[#allocation10 + $0x58] sm:$0xff]
    %v1047 = vld [vmem:[#allocation10 + $0x60] sm:$0xff]
    %v1048 = vld [vmem:[#allocation10 + $0x68] sm:$0xff]
    %v1049 = vld [vmem:[#allocation10 + $0x70] sm:$0xff]
    %v1050 = vld [vmem:[#allocation10 + $0x78] sm:$0xff]
    %v1051 = vld [vmem:[#allocation10 + $0x80] sm:$0xff]
    %v1052 = vld [vmem:[#allocation10 + $0x88] sm:$0xff]
    %v1053 = vld [vmem:[#allocation10 + $0x90] sm:$0xff]
    %v1054 = vld [vmem:[#allocation10 + $0x98] sm:$0xff]
    %v1055 = vld [vmem:[#allocation10 + $0xa0] sm:$0xff]
    %v1056 = vld [vmem:[#allocation10 + $0xa8] sm:$0xff]
    %v1057 = vld [vmem:[#allocation10 + $0xb0] sm:$0xff]
    %v1058 = vld [vmem:[#allocation10 + $0xb8] sm:$0xff]
    %v1059 = vld [vmem:[#allocation10 + $0xc0] sm:$0xff]
    %v1060 = vld [vmem:[#allocation10 + $0xc8] sm:$0xff]
    %v1061 = vld [vmem:[#allocation10 + $0xd0] sm:$0xff]
    %v1062 = vld [vmem:[#allocation10 + $0xd8] sm:$0xff]
    %v1063 = vld [vmem:[#allocation10 + $0xe0] sm:$0xff]
    %v1064 = vld [vmem:[#allocation10 + $0xe8] sm:$0xff]
    %v1065 = vld [vmem:[#allocation10 + $0xf0] sm:$0xff]
    %v1066 = vld [vmem:[#allocation10 + $0xf8] sm:$0xff]
    %v1067 = vld [vmem:[%s8] sm:$0x3]
    %v1069 = vlaneseq
    %v1070 = vshrl.u32 %v1069, 7
    %v1071 = vsub.s32 0, %v1070
    %v1072 = vrot.slane %v1067, %v1071
    %v1073 = vlaneseq
    %v1074 = vshrl.u32 %v1073, 7
    %v1075 = vsub.s32 1, %v1074
    %v1076 = vrot.slane %v1067, %v1075
    %v1111 = vunpack.c.l.b16 %v1035
    %v1112 = vunpack.c.h.b16 %v1035
    %v1113 = vunpack.c.l.b16 %v1036
    %v1114 = vunpack.c.h.b16 %v1036
    %v1115 = vunpack.c.l.b16 %v1037
    %v1116 = vunpack.c.h.b16 %v1037
    %v1117 = vunpack.c.l.b16 %v1038
    %v1118 = vunpack.c.h.b16 %v1038
    %v1119 = vunpack.c.l.b16 %v1039
    %v1120 = vunpack.c.h.b16 %v1039
    %v1121 = vunpack.c.l.b16 %v1040
    %v1122 = vunpack.c.h.b16 %v1040
    %v1123 = vunpack.c.l.b16 %v1041
    %v1124 = vunpack.c.h.b16 %v1041
    %v1125 = vunpack.c.l.b16 %v1042
    %v1126 = vunpack.c.h.b16 %v1042
    %v1127 = vunpack.c.l.b16 %v1043
    %v1128 = vunpack.c.h.b16 %v1043
    %v1129 = vunpack.c.l.b16 %v1044
    %v1130 = vunpack.c.h.b16 %v1044
    %v1131 = vunpack.c.l.b16 %v1045
    %v1132 = vunpack.c.h.b16 %v1045
    %v1133 = vunpack.c.l.b16 %v1046
    %v1134 = vunpack.c.h.b16 %v1046
    %v1135 = vunpack.c.l.b16 %v1047
    %v1136 = vunpack.c.h.b16 %v1047
    %v1137 = vunpack.c.l.b16 %v1048
    %v1138 = vunpack.c.h.b16 %v1048
    %v1139 = vunpack.c.l.b16 %v1049
    %v1140 = vunpack.c.h.b16 %v1049
    %v1141 = vunpack.c.l.b16 %v1050
    %v1142 = vunpack.c.h.b16 %v1050
    %v1143 = vunpack.c.l.b16 %v1051
    %v1144 = vunpack.c.h.b16 %v1051
    %v1145 = vunpack.c.l.b16 %v1052
    %v1146 = vunpack.c.h.b16 %v1052
    %v1147 = vunpack.c.l.b16 %v1053
    %v1148 = vunpack.c.h.b16 %v1053
    %v1149 = vunpack.c.l.b16 %v1054
    %v1150 = vunpack.c.h.b16 %v1054
    %v1151 = vunpack.c.l.b16 %v1055
    %v1152 = vunpack.c.h.b16 %v1055
    %v1153 = vunpack.c.l.b16 %v1056
    %v1154 = vunpack.c.h.b16 %v1056
    %v1155 = vunpack.c.l.b16 %v1057
    %v1156 = vunpack.c.h.b16 %v1057
    %v1157 = vunpack.c.l.b16 %v1058
    %v1158 = vunpack.c.h.b16 %v1058
    %v1159 = vunpack.c.l.b16 %v1059
    %v1160 = vunpack.c.h.b16 %v1059
    %v1161 = vunpack.c.l.b16 %v1060
    %v1162 = vunpack.c.h.b16 %v1060
    %v1163 = vunpack.c.l.b16 %v1061
    %v1164 = vunpack.c.h.b16 %v1061
    %v1165 = vunpack.c.l.b16 %v1062
    %v1166 = vunpack.c.h.b16 %v1062
    %v1167 = vunpack.c.l.b16 %v1063
    %v1168 = vunpack.c.h.b16 %v1063
    %v1169 = vunpack.c.l.b16 %v1064
    %v1170 = vunpack.c.h.b16 %v1064
    %v1171 = vunpack.c.l.b16 %v1065
    %v1172 = vunpack.c.h.b16 %v1065
    %v1173 = vunpack.c.l.b16 %v1066
    %v1174 = vunpack.c.h.b16 %v1066
    %v1175 = vpack.c.b16 %v1113, %v1111
    %v1176 = vpack.c.b16 %v1114, %v1112
    %v1177 = vpack.c.b16 %v1117, %v1115
    %v1178 = vpack.c.b16 %v1118, %v1116
    %v1179 = vpack.c.b16 %v1121, %v1119
    %v1180 = vpack.c.b16 %v1122, %v1120
    %v1181 = vpack.c.b16 %v1125, %v1123
    %v1182 = vpack.c.b16 %v1126, %v1124
    %v1183 = vpack.c.b16 %v1129, %v1127
    %v1184 = vpack.c.b16 %v1130, %v1128
    %v1185 = vpack.c.b16 %v1133, %v1131
    %v1186 = vpack.c.b16 %v1134, %v1132
    %v1187 = vpack.c.b16 %v1137, %v1135
    %v1188 = vpack.c.b16 %v1138, %v1136
    %v1189 = vpack.c.b16 %v1141, %v1139
    %v1190 = vpack.c.b16 %v1142, %v1140
    %v1191 = vpack.c.b16 %v1145, %v1143
    %v1192 = vpack.c.b16 %v1146, %v1144
    %v1193 = vpack.c.b16 %v1149, %v1147
    %v1194 = vpack.c.b16 %v1150, %v1148
    %v1195 = vpack.c.b16 %v1153, %v1151
    %v1196 = vpack.c.b16 %v1154, %v1152
    %v1197 = vpack.c.b16 %v1157, %v1155
    %v1198 = vpack.c.b16 %v1158, %v1156
    %v1199 = vpack.c.b16 %v1161, %v1159
    %v1200 = vpack.c.b16 %v1162, %v1160
    %v1201 = vpack.c.b16 %v1165, %v1163
    %v1202 = vpack.c.b16 %v1166, %v1164
    %v1203 = vpack.c.b16 %v1169, %v1167
    %v1204 = vpack.c.b16 %v1170, %v1168
    %v1205 = vpack.c.b16 %v1173, %v1171
    %v1206 = vpack.c.b16 %v1174, %v1172
    %1239 = vmatprep.subr.bf16.mxu0 %v1176
    %1240 = vmatpush1.bf16.msra.mxu0 %v1175
    %1241 = vmatprep.subr.bf16.mxu0 %v1178
    %1242 = vmatpush1.bf16.msra.mxu0 %v1177
    %1243 = vmatprep.subr.bf16.mxu0 %v1180
    %1244 = vmatpush1.bf16.msra.mxu0 %v1179
    %1245 = vmatprep.subr.bf16.mxu0 %v1182
    %1246 = vmatpush1.bf16.msra.mxu0 %v1181
    %1247 = vmatprep.subr.bf16.mxu0 %v1184
    %1248 = vmatpush1.bf16.msra.mxu0 %v1183
    %1249 = vmatprep.subr.bf16.mxu0 %v1186
    %1250 = vmatpush1.bf16.msra.mxu0 %v1185
    %1251 = vmatprep.subr.bf16.mxu0 %v1188
    %1252 = vmatpush1.bf16.msra.mxu0 %v1187
    %1253 = vmatprep.subr.bf16.mxu0 %v1190
    %1254 = vmatpush1.bf16.msra.mxu0 %v1189
    %1255 = vmatprep.subr.bf16.mxu0 %v1192
    %1256 = vmatpush1.bf16.msra.mxu0 %v1191
    %1257 = vmatprep.subr.bf16.mxu0 %v1194
    %1258 = vmatpush1.bf16.msra.mxu0 %v1193
    %1259 = vmatprep.subr.bf16.mxu0 %v1196
    %1260 = vmatpush1.bf16.msra.mxu0 %v1195
    %1261 = vmatprep.subr.bf16.mxu0 %v1198
    %1262 = vmatpush1.bf16.msra.mxu0 %v1197
    %1263 = vmatprep.subr.bf16.mxu0 %v1200
    %1264 = vmatpush1.bf16.msra.mxu0 %v1199
    %1265 = vmatprep.subr.bf16.mxu0 %v1202
    %1266 = vmatpush1.bf16.msra.mxu0 %v1201
    %1267 = vmatprep.subr.bf16.mxu0 %v1204
    %1268 = vmatpush1.bf16.msra.mxu0 %v1203
    %1269 = vmatprep.subr.bf16.mxu0 %v1206
    %1270 = vmatpush1.bf16.msra.mxu0 %v1205
    %1271 = vmatprep.mubr.bf16.mxu0 %v1032
    %1272 = vmatmul.mubr.bf16.gmra.mrb[0].mxu0 %v1031
    %v1273 = vpop.f32.mrb[0].mxu0
    %v1274 = vadd.f32 %v1072, %v1273
    %v1275 = vpop.f32.mrb[0].mxu0
    %v1276 = vadd.f32 %v1076, %v1275
    %v1277 = vpop.f32.mrb[0].mxu0
    %v1278 = vadd.f32 %v1072, %v1277
    %v1279 = vpop.f32.mrb[0].mxu0
    %v1280 = vadd.f32 %v1076, %v1279
    %1281 = vmatprep.mubr.bf16.mxu0 %v1034
    %1282 = vmatmul.mubr.bf16.gmra.mrb[0].mxu0 %v1033
    %v1283 = vpop.f32.mrb[0].mxu0
    %v1284 = vadd.f32 %v1072, %v1283
    %v1285 = vpop.f32.mrb[0].mxu0
    %v1286 = vadd.f32 %v1076, %v1285
    %v1287 = vpop.f32.mrb[0].mxu0
    %v1288 = vadd.f32 %v1072, %v1287
    %v1289 = vpop.f32.mrb[0].mxu0
    %v1290 = vadd.f32 %v1076, %v1289
    %1291 = vdwg.mxu0
    %v1292 = vld [vmem:[%s9] sm:$0x3]
    %v1293 = vld [vmem:[%s10] sm:$0x3]
    %v1294 = vadd.f32 %v1274, %v1276
    %1295 = vadd.xlane.f32.xlu0 %v1294
    %v1296 = vpop.xlane.xlu0 %1295
    %v1297 = vadd.f32 %v1278, %v1280
    %1298 = vadd.xlane.f32.xlu0 %v1297
    %v1299 = vpop.xlane.xlu0 %1298
    %v1300 = vadd.f32 %v1284, %v1286
    %1301 = vadd.xlane.f32.xlu0 %v1300
    %v1302 = vpop.xlane.xlu0 %1301
    %v1303 = vadd.f32 %v1288, %v1290
    %1304 = vadd.xlane.f32.xlu0 %v1303
    %v1305 = vpop.xlane.xlu0 %1304
    %v1306 = vmul.f32 %v1296, %v932
    %v1307 = vmul.f32 %v1299, %v932
    %v1308 = vmul.f32 %v1302, %v932
    %v1309 = vmul.f32 %v1305, %v932
    %v1310 = vsub.f32 %v1274, %v1306
    %v1311 = vsub.f32 %v1276, %v1306
    %v1312 = vsub.f32 %v1278, %v1307
    %v1313 = vsub.f32 %v1280, %v1307
    %v1314 = vsub.f32 %v1284, %v1308
    %v1315 = vsub.f32 %v1286, %v1308
    %v1316 = vsub.f32 %v1288, %v1309
    %v1317 = vsub.f32 %v1290, %v1309
    %v1318 = vmul.f32 %v1310, %v1310
    %v1319 = vmul.f32 %v1311, %v1311
    %v1320 = vmul.f32 %v1312, %v1312
    %v1321 = vmul.f32 %v1313, %v1313
    %v1322 = vmul.f32 %v1314, %v1314
    %v1323 = vmul.f32 %v1315, %v1315
    %v1324 = vmul.f32 %v1316, %v1316
    %v1325 = vmul.f32 %v1317, %v1317
    %v1326 = vadd.f32 %v1318, %v1319
    %1327 = vadd.xlane.f32.xlu0 %v1326
    %v1328 = vpop.xlane.xlu0 %1327
    %v1329 = vadd.f32 %v1320, %v1321
    %1330 = vadd.xlane.f32.xlu0 %v1329
    %v1331 = vpop.xlane.xlu0 %1330
    %v1332 = vadd.f32 %v1322, %v1323
    %1333 = vadd.xlane.f32.xlu0 %v1332
    %v1334 = vpop.xlane.xlu0 %1333
    %v1335 = vadd.f32 %v1324, %v1325
    %1336 = vadd.xlane.f32.xlu0 %v1335
    %v1337 = vpop.xlane.xlu0 %1336
    %v1338 = vmul.f32 %v1328, %v932
    %v1339 = vmul.f32 %v1331, %v932
    %v1340 = vmul.f32 %v1334, %v932
    %v1341 = vmul.f32 %v1337, %v932
    %v1342 = vadd.f32 %v1338, 1e-05
    %v1343 = vadd.f32 %v1339, 1e-05
    %v1344 = vadd.f32 %v1340, 1e-05
    %v1345 = vadd.f32 %v1341, 1e-05
    %v1346 = vrsqrt.pop %v1342
    %v1347 = vrsqrt.pop %v1343
    %v1348 = vrsqrt.pop %v1344
    %v1349 = vrsqrt.pop %v1345
    %v1350 = vmul.f32 %v1310, %v1346
    %v1351 = vmul.f32 %v1311, %v1346
    %v1352 = vmul.f32 %v1312, %v1347
    %v1353 = vmul.f32 %v1313, %v1347
    %v1354 = vmul.f32 %v1314, %v1348
    %v1355 = vmul.f32 %v1315, %v1348
    %v1356 = vmul.f32 %v1316, %v1349
    %v1357 = vmul.f32 %v1317, %v1349
    %v1359 = vlaneseq
    %v1360 = vshrl.u32 %v1359, 7
    %v1361 = vsub.s32 0, %v1360
    %v1362 = vrot.slane %v1292, %v1361
    %v1363 = vlaneseq
    %v1364 = vshrl.u32 %v1363, 7
    %v1365 = vsub.s32 1, %v1364
    %v1366 = vrot.slane %v1292, %v1365
    %v1369 = vmul.f32 %v1350, %v1362
    %v1370 = vmul.f32 %v1351, %v1366
    %v1371 = vmul.f32 %v1352, %v1362
    %v1372 = vmul.f32 %v1353, %v1366
    %v1373 = vmul.f32 %v1354, %v1362
    %v1374 = vmul.f32 %v1355, %v1366
    %v1375 = vmul.f32 %v1356, %v1362
    %v1376 = vmul.f32 %v1357, %v1366
    %v1378 = vlaneseq
    %v1379 = vshrl.u32 %v1378, 7
    %v1380 = vsub.s32 0, %v1379
    %v1381 = vrot.slane %v1293, %v1380
    %v1382 = vlaneseq
    %v1383 = vshrl.u32 %v1382, 7
    %v1384 = vsub.s32 1, %v1383
    %v1385 = vrot.slane %v1293, %v1384
    %v1388 = vadd.f32 %v1369, %v1381
    %v1389 = vadd.f32 %v1370, %v1385
    %v1390 = vadd.f32 %v1371, %v1381
    %v1391 = vadd.f32 %v1372, %v1385
    %v1392 = vadd.f32 %v1373, %v1381
    %v1393 = vadd.f32 %v1374, %v1385
    %v1394 = vadd.f32 %v1375, %v1381
    %v1395 = vadd.f32 %v1376, %v1385
    %v1396 = vmax.f32 %v1388, 0.0
    %v1397 = vmax.f32 %v1389, 0.0
    %v1398 = vmax.f32 %v1390, 0.0
    %v1399 = vmax.f32 %v1391, 0.0
    %v1400 = vmax.f32 %v1392, 0.0
    %v1401 = vmax.f32 %v1393, 0.0
    %v1402 = vmax.f32 %v1394, 0.0
    %v1403 = vmax.f32 %v1395, 0.0
    %v1404 = vpack.c.bf16 %v1398, %v1396
    %v1405 = vpack.c.bf16 %v1399, %v1397
    %v1406 = vpack.c.bf16 %v1402, %v1400
    %v1407 = vpack.c.bf16 %v1403, %v1401
    %v1408 = vld [vmem:[#allocation11] sm:$0xff]
    %v1409 = vld [vmem:[#allocation11 + $0x8] sm:$0xff]
    %v1410 = vld [vmem:[#allocation11 + $0x10] sm:$0xff]
    %v1411 = vld [vmem:[#allocation11 + $0x18] sm:$0xff]
    %v1412 = vld [vmem:[#allocation11 + $0x20] sm:$0xff]
    %v1413 = vld [vmem:[#allocation11 + $0x28] sm:$0xff]
    %v1414 = vld [vmem:[#allocation11 + $0x30] sm:$0xff]
    %v1415 = vld [vmem:[#allocation11 + $0x38] sm:$0xff]
    %v1416 = vld [vmem:[#allocation11 + $0x40] sm:$0xff]
    %v1417 = vld [vmem:[#allocation11 + $0x48] sm:$0xff]
    %v1418 = vld [vmem:[#allocation11 + $0x50] sm:$0xff]
    %v1419 = vld [vmem:[#allocation11 + $0x58] sm:$0xff]
    %v1420 = vld [vmem:[#allocation11 + $0x60] sm:$0xff]
    %v1421 = vld [vmem:[#allocation11 + $0x68] sm:$0xff]
    %v1422 = vld [vmem:[#allocation11 + $0x70] sm:$0xff]
    %v1423 = vld [vmem:[#allocation11 + $0x78] sm:$0xff]
    %v1424 = vld [vmem:[#allocation11 + $0x80] sm:$0xff]
    %v1425 = vld [vmem:[#allocation11 + $0x88] sm:$0xff]
    %v1426 = vld [vmem:[#allocation11 + $0x90] sm:$0xff]
    %v1427 = vld [vmem:[#allocation11 + $0x98] sm:$0xff]
    %v1428 = vld [vmem:[#allocation11 + $0xa0] sm:$0xff]
    %v1429 = vld [vmem:[#allocation11 + $0xa8] sm:$0xff]
    %v1430 = vld [vmem:[#allocation11 + $0xb0] sm:$0xff]
    %v1431 = vld [vmem:[#allocation11 + $0xb8] sm:$0xff]
    %v1432 = vld [vmem:[#allocation11 + $0xc0] sm:$0xff]
    %v1433 = vld [vmem:[#allocation11 + $0xc8] sm:$0xff]
    %v1434 = vld [vmem:[#allocation11 + $0xd0] sm:$0xff]
    %v1435 = vld [vmem:[#allocation11 + $0xd8] sm:$0xff]
    %v1436 = vld [vmem:[#allocation11 + $0xe0] sm:$0xff]
    %v1437 = vld [vmem:[#allocation11 + $0xe8] sm:$0xff]
    %v1438 = vld [vmem:[#allocation11 + $0xf0] sm:$0xff]
    %v1439 = vld [vmem:[#allocation11 + $0xf8] sm:$0xff]
    %v1440 = vld [vmem:[#allocation11 + $0x100] sm:$0xff]
    %v1441 = vld [vmem:[#allocation11 + $0x108] sm:$0xff]
    %v1442 = vld [vmem:[#allocation11 + $0x110] sm:$0xff]
    %v1443 = vld [vmem:[#allocation11 + $0x118] sm:$0xff]
    %v1444 = vld [vmem:[#allocation11 + $0x120] sm:$0xff]
    %v1445 = vld [vmem:[#allocation11 + $0x128] sm:$0xff]
    %v1446 = vld [vmem:[#allocation11 + $0x130] sm:$0xff]
    %v1447 = vld [vmem:[#allocation11 + $0x138] sm:$0xff]
    %v1448 = vld [vmem:[#allocation11 + $0x140] sm:$0xff]
    %v1449 = vld [vmem:[#allocation11 + $0x148] sm:$0xff]
    %v1450 = vld [vmem:[#allocation11 + $0x150] sm:$0xff]
    %v1451 = vld [vmem:[#allocation11 + $0x158] sm:$0xff]
    %v1452 = vld [vmem:[#allocation11 + $0x160] sm:$0xff]
    %v1453 = vld [vmem:[#allocation11 + $0x168] sm:$0xff]
    %v1454 = vld [vmem:[#allocation11 + $0x170] sm:$0xff]
    %v1455 = vld [vmem:[#allocation11 + $0x178] sm:$0xff]
    %v1456 = vld [vmem:[#allocation11 + $0x180] sm:$0xff]
    %v1457 = vld [vmem:[#allocation11 + $0x188] sm:$0xff]
    %v1458 = vld [vmem:[#allocation11 + $0x190] sm:$0xff]
    %v1459 = vld [vmem:[#allocation11 + $0x198] sm:$0xff]
    %v1460 = vld [vmem:[#allocation11 + $0x1a0] sm:$0xff]
    %v1461 = vld [vmem:[#allocation11 + $0x1a8] sm:$0xff]
    %v1462 = vld [vmem:[#allocation11 + $0x1b0] sm:$0xff]
    %v1463 = vld [vmem:[#allocation11 + $0x1b8] sm:$0xff]
    %v1464 = vld [vmem:[#allocation11 + $0x1c0] sm:$0xff]
    %v1465 = vld [vmem:[#allocation11 + $0x1c8] sm:$0xff]
    %v1466 = vld [vmem:[#allocation11 + $0x1d0] sm:$0xff]
    %v1467 = vld [vmem:[#allocation11 + $0x1d8] sm:$0xff]
    %v1468 = vld [vmem:[#allocation11 + $0x1e0] sm:$0xff]
    %v1469 = vld [vmem:[#allocation11 + $0x1e8] sm:$0xff]
    %v1470 = vld [vmem:[#allocation11 + $0x1f0] sm:$0xff]
    %v1471 = vld [vmem:[#allocation11 + $0x1f8] sm:$0xff]
    %v1472 = vld [vmem:[%s12] sm:$0xf]
    %v1474 = vlaneseq
    %v1475 = vshrl.u32 %v1474, 7
    %v1476 = vsub.s32 0, %v1475
    %v1477 = vrot.slane %v1472, %v1476
    %v1478 = vlaneseq
    %v1479 = vshrl.u32 %v1478, 7
    %v1480 = vsub.s32 1, %v1479
    %v1481 = vrot.slane %v1472, %v1480
    %v1482 = vlaneseq
    %v1483 = vshrl.u32 %v1482, 7
    %v1484 = vsub.s32 2, %v1483
    %v1485 = vrot.slane %v1472, %v1484
    %v1486 = vlaneseq
    %v1487 = vshrl.u32 %v1486, 7
    %v1488 = vsub.s32 3, %v1487
    %v1489 = vrot.slane %v1472, %v1488
    %v1558 = vunpack.c.l.b16 %v1408
    %v1559 = vunpack.c.h.b16 %v1408
    %v1560 = vunpack.c.l.b16 %v1409
    %v1561 = vunpack.c.h.b16 %v1409
    %v1562 = vunpack.c.l.b16 %v1410
    %v1563 = vunpack.c.h.b16 %v1410
    %v1564 = vunpack.c.l.b16 %v1411
    %v1565 = vunpack.c.h.b16 %v1411
    %v1566 = vunpack.c.l.b16 %v1412
    %v1567 = vunpack.c.h.b16 %v1412
    %v1568 = vunpack.c.l.b16 %v1413
    %v1569 = vunpack.c.h.b16 %v1413
    %v1570 = vunpack.c.l.b16 %v1414
    %v1571 = vunpack.c.h.b16 %v1414
    %v1572 = vunpack.c.l.b16 %v1415
    %v1573 = vunpack.c.h.b16 %v1415
    %v1574 = vunpack.c.l.b16 %v1416
    %v1575 = vunpack.c.h.b16 %v1416
    %v1576 = vunpack.c.l.b16 %v1417
    %v1577 = vunpack.c.h.b16 %v1417
    %v1578 = vunpack.c.l.b16 %v1418
    %v1579 = vunpack.c.h.b16 %v1418
    %v1580 = vunpack.c.l.b16 %v1419
    %v1581 = vunpack.c.h.b16 %v1419
    %v1582 = vunpack.c.l.b16 %v1420
    %v1583 = vunpack.c.h.b16 %v1420
    %v1584 = vunpack.c.l.b16 %v1421
    %v1585 = vunpack.c.h.b16 %v1421
    %v1586 = vunpack.c.l.b16 %v1422
    %v1587 = vunpack.c.h.b16 %v1422
    %v1588 = vunpack.c.l.b16 %v1423
    %v1589 = vunpack.c.h.b16 %v1423
    %v1590 = vunpack.c.l.b16 %v1424
    %v1591 = vunpack.c.h.b16 %v1424
    %v1592 = vunpack.c.l.b16 %v1425
    %v1593 = vunpack.c.h.b16 %v1425
    %v1594 = vunpack.c.l.b16 %v1426
    %v1595 = vunpack.c.h.b16 %v1426
    %v1596 = vunpack.c.l.b16 %v1427
    %v1597 = vunpack.c.h.b16 %v1427
    %v1598 = vunpack.c.l.b16 %v1428
    %v1599 = vunpack.c.h.b16 %v1428
    %v1600 = vunpack.c.l.b16 %v1429
    %v1601 = vunpack.c.h.b16 %v1429
    %v1602 = vunpack.c.l.b16 %v1430
    %v1603 = vunpack.c.h.b16 %v1430
    %v1604 = vunpack.c.l.b16 %v1431
    %v1605 = vunpack.c.h.b16 %v1431
    %v1606 = vunpack.c.l.b16 %v1432
    %v1607 = vunpack.c.h.b16 %v1432
    %v1608 = vunpack.c.l.b16 %v1433
    %v1609 = vunpack.c.h.b16 %v1433
    %v1610 = vunpack.c.l.b16 %v1434
    %v1611 = vunpack.c.h.b16 %v1434
    %v1612 = vunpack.c.l.b16 %v1435
    %v1613 = vunpack.c.h.b16 %v1435
    %v1614 = vunpack.c.l.b16 %v1436
    %v1615 = vunpack.c.h.b16 %v1436
    %v1616 = vunpack.c.l.b16 %v1437
    %v1617 = vunpack.c.h.b16 %v1437
    %v1618 = vunpack.c.l.b16 %v1438
    %v1619 = vunpack.c.h.b16 %v1438
    %v1620 = vunpack.c.l.b16 %v1439
    %v1621 = vunpack.c.h.b16 %v1439
    %v1622 = vunpack.c.l.b16 %v1440
    %v1623 = vunpack.c.h.b16 %v1440
    %v1624 = vunpack.c.l.b16 %v1441
    %v1625 = vunpack.c.h.b16 %v1441
    %v1626 = vunpack.c.l.b16 %v1442
    %v1627 = vunpack.c.h.b16 %v1442
    %v1628 = vunpack.c.l.b16 %v1443
    %v1629 = vunpack.c.h.b16 %v1443
    %v1630 = vunpack.c.l.b16 %v1444
    %v1631 = vunpack.c.h.b16 %v1444
    %v1632 = vunpack.c.l.b16 %v1445
    %v1633 = vunpack.c.h.b16 %v1445
    %v1634 = vunpack.c.l.b16 %v1446
    %v1635 = vunpack.c.h.b16 %v1446
    %v1636 = vunpack.c.l.b16 %v1447
    %v1637 = vunpack.c.h.b16 %v1447
    %v1638 = vunpack.c.l.b16 %v1448
    %v1639 = vunpack.c.h.b16 %v1448
    %v1640 = vunpack.c.l.b16 %v1449
    %v1641 = vunpack.c.h.b16 %v1449
    %v1642 = vunpack.c.l.b16 %v1450
    %v1643 = vunpack.c.h.b16 %v1450
    %v1644 = vunpack.c.l.b16 %v1451
    %v1645 = vunpack.c.h.b16 %v1451
    %v1646 = vunpack.c.l.b16 %v1452
    %v1647 = vunpack.c.h.b16 %v1452
    %v1648 = vunpack.c.l.b16 %v1453
    %v1649 = vunpack.c.h.b16 %v1453
    %v1650 = vunpack.c.l.b16 %v1454
    %v1651 = vunpack.c.h.b16 %v1454
    %v1652 = vunpack.c.l.b16 %v1455
    %v1653 = vunpack.c.h.b16 %v1455
    %v1654 = vunpack.c.l.b16 %v1456
    %v1655 = vunpack.c.h.b16 %v1456
    %v1656 = vunpack.c.l.b16 %v1457
    %v1657 = vunpack.c.h.b16 %v1457
    %v1658 = vunpack.c.l.b16 %v1458
    %v1659 = vunpack.c.h.b16 %v1458
    %v1660 = vunpack.c.l.b16 %v1459
    %v1661 = vunpack.c.h.b16 %v1459
    %v1662 = vunpack.c.l.b16 %v1460
    %v1663 = vunpack.c.h.b16 %v1460
    %v1664 = vunpack.c.l.b16 %v1461
    %v1665 = vunpack.c.h.b16 %v1461
    %v1666 = vunpack.c.l.b16 %v1462
    %v1667 = vunpack.c.h.b16 %v1462
    %v1668 = vunpack.c.l.b16 %v1463
    %v1669 = vunpack.c.h.b16 %v1463
    %v1670 = vunpack.c.l.b16 %v1464
    %v1671 = vunpack.c.h.b16 %v1464
    %v1672 = vunpack.c.l.b16 %v1465
    %v1673 = vunpack.c.h.b16 %v1465
    %v1674 = vunpack.c.l.b16 %v1466
    %v1675 = vunpack.c.h.b16 %v1466
    %v1676 = vunpack.c.l.b16 %v1467
    %v1677 = vunpack.c.h.b16 %v1467
    %v1678 = vunpack.c.l.b16 %v1468
    %v1679 = vunpack.c.h.b16 %v1468
    %v1680 = vunpack.c.l.b16 %v1469
    %v1681 = vunpack.c.h.b16 %v1469
    %v1682 = vunpack.c.l.b16 %v1470
    %v1683 = vunpack.c.h.b16 %v1470
    %v1684 = vunpack.c.l.b16 %v1471
    %v1685 = vunpack.c.h.b16 %v1471
    %v1686 = vpack.c.b16 %v1562, %v1558
    %v1687 = vpack.c.b16 %v1563, %v1559
    %v1688 = vpack.c.b16 %v1564, %v1560
    %v1689 = vpack.c.b16 %v1565, %v1561
    %v1690 = vpack.c.b16 %v1570, %v1566
    %v1691 = vpack.c.b16 %v1571, %v1567
    %v1692 = vpack.c.b16 %v1572, %v1568
    %v1693 = vpack.c.b16 %v1573, %v1569
    %v1694 = vpack.c.b16 %v1578, %v1574
    %v1695 = vpack.c.b16 %v1579, %v1575
    %v1696 = vpack.c.b16 %v1580, %v1576
    %v1697 = vpack.c.b16 %v1581, %v1577
    %v1698 = vpack.c.b16 %v1586, %v1582
    %v1699 = vpack.c.b16 %v1587, %v1583
    %v1700 = vpack.c.b16 %v1588, %v1584
    %v1701 = vpack.c.b16 %v1589, %v1585
    %v1702 = vpack.c.b16 %v1594, %v1590
    %v1703 = vpack.c.b16 %v1595, %v1591
    %v1704 = vpack.c.b16 %v1596, %v1592
    %v1705 = vpack.c.b16 %v1597, %v1593
    %v1706 = vpack.c.b16 %v1602, %v1598
    %v1707 = vpack.c.b16 %v1603, %v1599
    %v1708 = vpack.c.b16 %v1604, %v1600
    %v1709 = vpack.c.b16 %v1605, %v1601
    %v1710 = vpack.c.b16 %v1610, %v1606
    %v1711 = vpack.c.b16 %v1611, %v1607
    %v1712 = vpack.c.b16 %v1612, %v1608
    %v1713 = vpack.c.b16 %v1613, %v1609
    %v1714 = vpack.c.b16 %v1618, %v1614
    %v1715 = vpack.c.b16 %v1619, %v1615
    %v1716 = vpack.c.b16 %v1620, %v1616
    %v1717 = vpack.c.b16 %v1621, %v1617
    %v1718 = vpack.c.b16 %v1626, %v1622
    %v1719 = vpack.c.b16 %v1627, %v1623
    %v1720 = vpack.c.b16 %v1628, %v1624
    %v1721 = vpack.c.b16 %v1629, %v1625
    %v1722 = vpack.c.b16 %v1634, %v1630
    %v1723 = vpack.c.b16 %v1635, %v1631
    %v1724 = vpack.c.b16 %v1636, %v1632
    %v1725 = vpack.c.b16 %v1637, %v1633
    %v1726 = vpack.c.b16 %v1642, %v1638
    %v1727 = vpack.c.b16 %v1643, %v1639
    %v1728 = vpack.c.b16 %v1644, %v1640
    %v1729 = vpack.c.b16 %v1645, %v1641
    %v1730 = vpack.c.b16 %v1650, %v1646
    %v1731 = vpack.c.b16 %v1651, %v1647
    %v1732 = vpack.c.b16 %v1652, %v1648
    %v1733 = vpack.c.b16 %v1653, %v1649
    %v1734 = vpack.c.b16 %v1658, %v1654
    %v1735 = vpack.c.b16 %v1659, %v1655
    %v1736 = vpack.c.b16 %v1660, %v1656
    %v1737 = vpack.c.b16 %v1661, %v1657
    %v1738 = vpack.c.b16 %v1666, %v1662
    %v1739 = vpack.c.b16 %v1667, %v1663
    %v1740 = vpack.c.b16 %v1668, %v1664
    %v1741 = vpack.c.b16 %v1669, %v1665
    %v1742 = vpack.c.b16 %v1674, %v1670
    %v1743 = vpack.c.b16 %v1675, %v1671
    %v1744 = vpack.c.b16 %v1676, %v1672
    %v1745 = vpack.c.b16 %v1677, %v1673
    %v1746 = vpack.c.b16 %v1682, %v1678
    %v1747 = vpack.c.b16 %v1683, %v1679
    %v1748 = vpack.c.b16 %v1684, %v1680
    %v1749 = vpack.c.b16 %v1685, %v1681
    %1814 = vmatprep.subr.bf16.mxu0 %v1687
    %1815 = vmatpush1.bf16.msra.mxu0 %v1686
    %1816 = vmatprep.subr.bf16.mxu0 %v1691
    %1817 = vmatpush1.bf16.msra.mxu0 %v1690
    %1818 = vmatprep.subr.bf16.mxu0 %v1695
    %1819 = vmatpush1.bf16.msra.mxu0 %v1694
    %1820 = vmatprep.subr.bf16.mxu0 %v1699
    %1821 = vmatpush1.bf16.msra.mxu0 %v1698
    %1822 = vmatprep.subr.bf16.mxu0 %v1703
    %1823 = vmatpush1.bf16.msra.mxu0 %v1702
    %1824 = vmatprep.subr.bf16.mxu0 %v1707
    %1825 = vmatpush1.bf16.msra.mxu0 %v1706
    %1826 = vmatprep.subr.bf16.mxu0 %v1711
    %1827 = vmatpush1.bf16.msra.mxu0 %v1710
    %1828 = vmatprep.subr.bf16.mxu0 %v1715
    %1829 = vmatpush1.bf16.msra.mxu0 %v1714
    %1830 = vmatprep.subr.bf16.mxu0 %v1719
    %1831 = vmatpush1.bf16.msra.mxu0 %v1718
    %1832 = vmatprep.subr.bf16.mxu0 %v1723
    %1833 = vmatpush1.bf16.msra.mxu0 %v1722
    %1834 = vmatprep.subr.bf16.mxu0 %v1727
    %1835 = vmatpush1.bf16.msra.mxu0 %v1726
    %1836 = vmatprep.subr.bf16.mxu0 %v1731
    %1837 = vmatpush1.bf16.msra.mxu0 %v1730
    %1838 = vmatprep.subr.bf16.mxu0 %v1735
    %1839 = vmatpush1.bf16.msra.mxu0 %v1734
    %1840 = vmatprep.subr.bf16.mxu0 %v1739
    %1841 = vmatpush1.bf16.msra.mxu0 %v1738
    %1842 = vmatprep.subr.bf16.mxu0 %v1743
    %1843 = vmatpush1.bf16.msra.mxu0 %v1742
    %1844 = vmatprep.subr.bf16.mxu0 %v1747
    %1845 = vmatpush1.bf16.msra.mxu0 %v1746
    %1846 = vmatprep.mubr.bf16.mxu0 %v1405
    %1847 = vmatmul.mubr.bf16.gmra.mrb[0].mxu0 %v1404
    %v1848 = vpop.f32.mrb[0].mxu0
    %v1849 = vadd.f32 %v1477, %v1848
    %v1850 = vpop.f32.mrb[0].mxu0
    %v1851 = vadd.f32 %v1481, %v1850
    %v1852 = vpop.f32.mrb[0].mxu0
    %v1853 = vadd.f32 %v1477, %v1852
    %v1854 = vpop.f32.mrb[0].mxu0
    %v1855 = vadd.f32 %v1481, %v1854
    %1856 = vmatprep.mubr.bf16.mxu0 %v1407
    %1857 = vmatmul.mubr.bf16.gmra.mrb[0].mxu0 %v1406
    %v1858 = vpop.f32.mrb[0].mxu0
    %v1859 = vadd.f32 %v1477, %v1858
    %v1860 = vpop.f32.mrb[0].mxu0
    %v1861 = vadd.f32 %v1481, %v1860
    %v1862 = vpop.f32.mrb[0].mxu0
    %v1863 = vadd.f32 %v1477, %v1862
    %v1864 = vpop.f32.mrb[0].mxu0
    %v1865 = vadd.f32 %v1481, %v1864
    %1866 = vdwg.mxu0
    %1867 = vmatprep.subr.bf16.mxu0 %v1689
    %1868 = vmatpush1.bf16.msra.mxu0 %v1688
    %1869 = vmatprep.subr.bf16.mxu0 %v1693
    %1870 = vmatpush1.bf16.msra.mxu0 %v1692
    %1871 = vmatprep.subr.bf16.mxu0 %v1697
    %1872 = vmatpush1.bf16.msra.mxu0 %v1696
    %1873 = vmatprep.subr.bf16.mxu0 %v1701
    %1874 = vmatpush1.bf16.msra.mxu0 %v1700
    %1875 = vmatprep.subr.bf16.mxu0 %v1705
    %1876 = vmatpush1.bf16.msra.mxu0 %v1704
    %1877 = vmatprep.subr.bf16.mxu0 %v1709
    %1878 = vmatpush1.bf16.msra.mxu0 %v1708
    %1879 = vmatprep.subr.bf16.mxu0 %v1713
    %1880 = vmatpush1.bf16.msra.mxu0 %v1712
    %1881 = vmatprep.subr.bf16.mxu0 %v1717
    %1882 = vmatpush1.bf16.msra.mxu0 %v1716
    %1883 = vmatprep.subr.bf16.mxu0 %v1721
    %1884 = vmatpush1.bf16.msra.mxu0 %v1720
    %1885 = vmatprep.subr.bf16.mxu0 %v1725
    %1886 = vmatpush1.bf16.msra.mxu0 %v1724
    %1887 = vmatprep.subr.bf16.mxu0 %v1729
    %1888 = vmatpush1.bf16.msra.mxu0 %v1728
    %1889 = vmatprep.subr.bf16.mxu0 %v1733
    %1890 = vmatpush1.bf16.msra.mxu0 %v1732
    %1891 = vmatprep.subr.bf16.mxu0 %v1737
    %1892 = vmatpush1.bf16.msra.mxu0 %v1736
    %1893 = vmatprep.subr.bf16.mxu0 %v1741
    %1894 = vmatpush1.bf16.msra.mxu0 %v1740
    %1895 = vmatprep.subr.bf16.mxu0 %v1745
    %1896 = vmatpush1.bf16.msra.mxu0 %v1744
    %1897 = vmatprep.subr.bf16.mxu0 %v1749
    %1898 = vmatpush1.bf16.msra.mxu0 %v1748
    %1899 = vmatprep.mubr.bf16.mxu0 %v1405
    %1900 = vmatmul.mubr.bf16.gmra.mrb[0].mxu0 %v1404
    %v1901 = vpop.f32.mrb[0].mxu0
    %v1902 = vadd.f32 %v1485, %v1901
    %v1903 = vpop.f32.mrb[0].mxu0
    %v1904 = vadd.f32 %v1489, %v1903
    %v1905 = vpop.f32.mrb[0].mxu0
    %v1906 = vadd.f32 %v1485, %v1905
    %v1907 = vpop.f32.mrb[0].mxu0
    %v1908 = vadd.f32 %v1489, %v1907
    %1909 = vmatprep.mubr.bf16.mxu0 %v1407
    %1910 = vmatmul.mubr.bf16.gmra.mrb[0].mxu0 %v1406
    %v1911 = vpop.f32.mrb[0].mxu0
    %v1912 = vadd.f32 %v1485, %v1911
    %v1913 = vpop.f32.mrb[0].mxu0
    %v1914 = vadd.f32 %v1489, %v1913
    %v1915 = vpop.f32.mrb[0].mxu0
    %v1916 = vadd.f32 %v1485, %v1915
    %v1917 = vpop.f32.mrb[0].mxu0
    %v1918 = vadd.f32 %v1489, %v1917
    %1919 = vdwg.mxu0
    %1920 = vst [vmem:[#allocation13] sm:$0xff] %v1849
    %1921 = vst [vmem:[#allocation13 + $0x8] sm:$0xff] %v1851
    %1922 = vst [vmem:[#allocation13 + $0x10] sm:$0xff] %v1902
    %1923 = vst [vmem:[#allocation13 + $0x18] sm:$0xff] %v1904
    %1924 = vst [vmem:[#allocation13 + $0x20] sm:$0xff] %v1853
    %1925 = vst [vmem:[#allocation13 + $0x28] sm:$0xff] %v1855
    %1926 = vst [vmem:[#allocation13 + $0x30] sm:$0xff] %v1906
    %1927 = vst [vmem:[#allocation13 + $0x38] sm:$0xff] %v1908
    %1928 = vst [vmem:[#allocation13 + $0x40] sm:$0xff] %v1859
    %1929 = vst [vmem:[#allocation13 + $0x48] sm:$0xff] %v1861
    %1930 = vst [vmem:[#allocation13 + $0x50] sm:$0xff] %v1912
    %1931 = vst [vmem:[#allocation13 + $0x58] sm:$0xff] %v1914
    %1932 = vst [vmem:[#allocation13 + $0x60] sm:$0xff] %v1863
    %1933 = vst [vmem:[#allocation13 + $0x68] sm:$0xff] %v1865
    %1934 = vst [vmem:[#allocation13 + $0x70] sm:$0xff] %v1916
    %1935 = vst [vmem:[#allocation13 + $0x78] sm:$0xff] %v1918
    // Predicated region
    $region78: #{tpu_custom_call.1} parent=1 // pred_check
      _
    $region79: #{tpu_custom_call.1} parent=1 // pred_check_branch
      %1937 = sbr.rel (0) target = $region81
    $region80: #{tpu_custom_call.1} parent=1 // pred_region
      %s1939 = ssub.s32 2048, 2048
      %1940 = vsyncadd [#allocation4], %s1939
      %s1941 = sshll.u32 [#allocation13], 4
      %s1942 = int_to_ptr.vmem [resolvable:$true] %s1941
      %1947 = dma.vmem_to_hbm [thread:$0]  %s1942, 2048, %s13, [#allocation4], 512, 512, 32
    $region81: #{tpu_custom_call.1} parent=1 // pred_fallthru
      _
    // Predicated region
    $region82: #{tpu_custom_call.1} parent=1 // pred_check
      _
    $region83: #{tpu_custom_call.1} parent=1 // pred_check_branch
      %1949 = sbr.rel (0) target = $region85
    $region84: #{tpu_custom_call.1} parent=1 // pred_region
      %1950 = dma.done [#allocation4], 2048
    $region85: #{tpu_custom_call.1} parent=1 // pred_fallthru
      _
    %1951 = vsyncpa [#allocation3], 1
    %1952 = vsyncpa [#allocation6], 1
    %1953 = vsyncpa [#allocation9], 1
    %1954 = vsyncpa [#allocation12], 1
    %1955 = vsyncpa [#allocation4], 1

</llo_original>
